<compile_context>
chip_gen: v7x
topology: tpu7x:2x2x1
jax: 0.10.0
libtpu: 0.0.40
codegen_flags: <defaults>
</compile_context>

<pallas_src>
import jax
import jax.numpy as jnp
import numpy as np
from jax.experimental import pallas as pl
from jax.experimental.pallas import tpu as pltpu

# Config (stand-ins for cfg.res_channel_num / cfg.res_width_expand and dim)
DIM = 32                 # od  (input channel count of the head)
PLANES = 16              # cfg.res_channel_num
EXPAND = 4               # cfg.res_width_expand
WIDTH = PLANES * EXPAND  # bottleneck width
BN_EPS = 1e-5

# ----------------------- packed-parameter slab layout ---------------------
# (cout, cin) per 1x1-conv matmul, in forward order:
#   conv1, (res1: a,b,c), (res2: a,b,c), (res3: a,b,c), predict_coords
_LAYER_DIMS = ([(PLANES, DIM)]
               + [(WIDTH, PLANES), (WIDTH, WIDTH), (PLANES, WIDTH)] * 3
               + [(3, PLANES)])


def _round8(n):
    return (n + 7) // 8 * 8


_OFFSETS = []
_o = 0
for _cout, _cin in _LAYER_DIMS:
    _OFFSETS.append(_o)
    _o += _round8(_cout)          # every row-block start is a multiple of 16
SLAB_ROWS = _o                    # 16 + 3*(64+64+16) + 8 = 456
SLAB_COLS = max(c for _, c in _LAYER_DIMS)   # 64


# ----------------------------- Pallas kernel ------------------------------

def head_kernel(x_ref, w_ref, b_ref, coords_ref, feat_ref):
    """x_ref: (DIM, TP) f32 pixel tile (channels on sublanes, pixels on lanes).

    w_ref: (SLAB_ROWS, SLAB_COLS) bf16 packed conv+BN-folded weights.
    b_ref: (SLAB_ROWS, 1)         f32  packed folded biases.
    coords_ref: (3, TP).  feat_ref: (PLANES, TP).
    """

    def affine(layer, h_bf16):
        cout, cin = _LAYER_DIMS[layer]
        off = _OFFSETS[layer]
        w = w_ref[off:off + cout, 0:cin]          # (cout, cin) bf16, static slice
        b = b_ref[off:off + cout, :]              # (cout, 1)   f32
        return jnp.dot(w, h_bf16, preferred_element_type=jnp.float32) + b

    # Cast to bf16 only at the MXU boundary; elementwise math stays f32.
    x = x_ref[...].astype(jnp.bfloat16)           # (DIM, TP)

    # conv1 (1x1 conv + folded BN) + ReLU
    h = jnp.maximum(affine(0, x), 0.0)            # (PLANES, TP) f32

    # res1..res3: Bottleneck(allconv1=True) = three 1x1 conv+BN, residual, ReLU
    for blk in range(3):
        base = 1 + 3 * blk
        t = jnp.maximum(affine(base + 0, h.astype(jnp.bfloat16)), 0.0)
        t = jnp.maximum(affine(base + 1, t.astype(jnp.bfloat16)), 0.0)
        t = affine(base + 2, t.astype(jnp.bfloat16))
        h = jnp.maximum(t + h, 0.0)               # (PLANES, TP) f32

    # predict_coords: 1x1 conv with bias (no BN).  Its rows are padded to 8 in
    # the slab (rows 3..7 are zero); compute padded and keep the first 3 rows.
    off = _OFFSETS[-1]
    wp = w_ref[off:off + 8, 0:PLANES]
    bp = b_ref[off:off + 8, :]
    coords = jnp.dot(wp, h.astype(jnp.bfloat16),
                     preferred_element_type=jnp.float32) + bp
    coords_ref[...] = coords[0:3, :].astype(coords_ref.dtype)
    feat_ref[...] = h.astype(feat_ref.dtype)


# ------------------------------ JAX wrapper -------------------------------

def prediction_res_head(x_nchw, w_slab, b_slab, *, tile_p=512,
                        out_dtype=jnp.float32):
    N, C, H, W = x_nchw.shape
    assert C == DIM
    HW = H * W
    tile_p = min(tile_p, HW)
    assert HW % tile_p == 0, "H*W must be a multiple of tile_p"
    assert tile_p % 128 == 0 or tile_p == HW

    # NCHW -> (N, C, H*W): pure reshape, no transpose / extra HBM pass.
    x = x_nchw.reshape(N, C, HW)

    grid = (N, HW // tile_p)

    in_specs = [
        pl.BlockSpec((None, C, tile_p), lambda n, t: (n, 0, t)),
        pl.BlockSpec((SLAB_ROWS, SLAB_COLS), lambda n, t: (0, 0)),
        pl.BlockSpec((SLAB_ROWS, 1), lambda n, t: (0, 0)),
    ]
    out_specs = [
        pl.BlockSpec((None, 3, tile_p), lambda n, t: (n, 0, t)),
        pl.BlockSpec((None, PLANES, tile_p), lambda n, t: (n, 0, t)),
    ]
    out_shape = (jax.ShapeDtypeStruct((N, 3, HW), out_dtype),
                 jax.ShapeDtypeStruct((N, PLANES, HW), out_dtype))

    coords, feat = pl.pallas_call(
        head_kernel,
        grid_spec=pltpu.PrefetchScalarGridSpec(
            num_scalar_prefetch=0,
            grid=grid,
            in_specs=in_specs,
            out_specs=out_specs),
        out_shape=out_shape,
        compiler_params=pltpu.CompilerParams(
            dimension_semantics=("parallel", "parallel"),
            vmem_limit_bytes=32 * 1024 * 1024),
    )(x, w_slab, b_slab)

    # (N, c, H*W) -> NCHW: pure reshape.
    return coords.reshape(N, 3, H, W), feat.reshape(N, PLANES, H, W)


# --------------------------- parameter set-up -----------------------------

def _fold_conv_bn(w_oi, conv_b, gamma, beta, mean, var, eps=BN_EPS):
    """Fold eval-mode BatchNorm into a 1x1 conv.

    w_oi: [Cout, Cin] (PyTorch conv1x1 weight with 1x1 spatial dims squeezed).
    Returns weight [Cout, Cin] and bias [Cout] such that
        y = W @ x + b  ==  BN(conv(x))      (per pixel).
    """
    s = gamma / jnp.sqrt(var + eps)
    w = w_oi * s[:, None]
    b = conv_b if conv_b is not None else jnp.zeros_like(gamma)
    b = (b - mean) * s + beta
    return w.astype(jnp.float32), b.astype(jnp.float32)


def init_params(key):
    keys = iter(jax.random.split(key, 64))

    def conv_w(cout, cin):
        return jax.random.normal(next(keys), (cout, cin), jnp.float32) / jnp.sqrt(cin)

    def bn_params(c):
        gamma = jax.random.uniform(next(keys), (c,), jnp.float32, 0.5, 1.5)
        beta = jax.random.normal(next(keys), (c,), jnp.float32) * 0.1
        mean = jax.random.normal(next(keys), (c,), jnp.float32) * 0.1
        var = jax.random.uniform(next(keys), (c,), jnp.float32, 0.5, 1.5)
        return gamma, beta, mean, var

    weights, biases = [], []

    # conv1 = conv_bn(DIM, PLANES, k=1, pad=0): conv(bias=True) + BN + ReLU
    w = conv_w(PLANES, DIM)
    b = jax.random.normal(next(keys), (PLANES,), jnp.float32) * 0.1
    wf, bf = _fold_conv_bn(w, b, *bn_params(PLANES))
    weights.append(wf); biases.append(bf)

    # res1..res3: Bottleneck(planes, planes, width, allconv1=True)
    for _ in range(3):
        for cout, cin in [(WIDTH, PLANES), (WIDTH, WIDTH), (PLANES, WIDTH)]:
            wf, bf = _fold_conv_bn(conv_w(cout, cin), None, *bn_params(cout))
            weights.append(wf); biases.append(bf)

    # predict_coords = conv1x1(PLANES, 3, bias=True)  (no BN)
    wp = conv_w(3, PLANES)
    bp = jax.random.normal(next(keys), (3,), jnp.float32) * 0.1
    weights.append(wp); biases.append(bp)
    return weights, biases


def pack_params(weights, biases):
    """Pack the 11 folded (Cout,Cin) weights / (Cout,) biases into two slabs."""
    w_slab = np.zeros((SLAB_ROWS, SLAB_COLS), np.float32)
    b_slab = np.zeros((SLAB_ROWS, 1), np.float32)
    for (cout, cin), off, w, b in zip(_LAYER_DIMS, _OFFSETS, weights, biases):
        w_slab[off:off + cout, :cin] = np.asarray(w, np.float32)
        b_slab[off:off + cout, 0] = np.asarray(b, np.float32)
    return (jnp.asarray(w_slab, dtype=jnp.bfloat16),
            jnp.asarray(b_slab, dtype=jnp.float32))


# ------------------------- pure-JAX reference -----------------------------

def reference(x_nchw, weights, biases):
    """Matches the kernel numerics: bf16 MXU operands, f32 accumulation."""
    N, C, H, W = x_nchw.shape
    x = x_nchw.reshape(N, C, H * W).astype(jnp.float32)

    def mm(w, b, h):
        y = jnp.einsum('oc,ncp->nop', w.astype(jnp.bfloat16),
                       h.astype(jnp.bfloat16),
                       preferred_element_type=jnp.float32)
        return y + b[None, :, None]

    h = jnp.maximum(mm(weights[0], biases[0], x), 0.0)
    for blk in range(3):
        i = 1 + 3 * blk
        t = jnp.maximum(mm(weights[i], biases[i], h), 0.0)
        t = jnp.maximum(mm(weights[i + 1], biases[i + 1], t), 0.0)
        t = mm(weights[i + 2], biases[i + 2], t)
        h = jnp.maximum(t + h, 0.0)
    coords = mm(weights[10], biases[10], h)
    return coords.reshape(N, 3, H, W), h.reshape(N, PLANES, H, W)


# --------------------------------- main ------------------------------------

if __name__ == "__main__":
    key = jax.random.PRNGKey(0)
    k_x, k_p = jax.random.split(key)

    N, H, W = 2, 16, 16
    x = jax.random.normal(k_x, (N, DIM, H, W), jnp.float32)  # NCHW, like PyTorch
    weights, biases = init_params(k_p)
    w_slab, b_slab = pack_params(weights, biases)

    coords, feat = prediction_res_head(x, w_slab, b_slab, tile_p=512)
    coords = jax.block_until_ready(coords)
    feat = jax.block_until_ready(feat)

    ref_coords, ref_feat = reference(x, weights, biases)
    assert coords.shape == (N, 3, H, W)
    assert feat.shape == (N, PLANES, H, W)
    assert jnp.allclose(coords, ref_coords, atol=2e-3, rtol=2e-3)
    assert jnp.allclose(feat, ref_feat, atol=2e-3, rtol=2e-3)

    print("KERNEL_OK")
</pallas_src>

<mosaic_0001>
module attributes {stable_mosaic.version = 11 : i64} {
  func.func @head_kernel(%arg0: i32, %arg1: i32, %arg2: memref<1x32x256xf32, #tpu.memory_space<vmem>>, %arg3: memref<456x64xbf16, #tpu.memory_space<vmem>>, %arg4: memref<456x1xf32, #tpu.memory_space<vmem>>, %arg5: memref<1x3x256xf32, #tpu.memory_space<vmem>>, %arg6: memref<1x16x256xf32, #tpu.memory_space<vmem>>) attributes {dimension_semantics = [#tpu.dimension_semantics<parallel>, #tpu.dimension_semantics<parallel>], iteration_bounds = array<i64: 2, 1>, scalar_prefetch = 0 : i64, scratch_operands = 0 : i64, tpu.core_type = #tpu.core_type<tc>, window_params = [{transform_indices = @transform_0, window_bounds = array<i64: 1, 32, 256>}, {pipeline_mode = #tpu.pipeline_mode<synchronous>, transform_indices = @transform_1, window_bounds = array<i64: 456, 64>}, {pipeline_mode = #tpu.pipeline_mode<synchronous>, transform_indices = @transform_2, window_bounds = array<i64: 456, 1>}, {transform_indices = @transform_3, window_bounds = array<i64: 1, 3, 256>}, {transform_indices = @transform_4, window_bounds = array<i64: 1, 16, 256>}]} {
    %c0 = arith.constant 0 : index
    %c0_0 = arith.constant 0 : index
    %c0_1 = arith.constant 0 : index
    %0 = vector.load %arg2[%c0, %c0_0, %c0_1] : memref<1x32x256xf32, #tpu.memory_space<vmem>>, vector<1x32x256xf32>
    %1 = vector.shape_cast %0 : vector<1x32x256xf32> to vector<32x256xf32>
    %2 = arith.truncf %1 : vector<32x256xf32> to vector<32x256xbf16>
    %c0_2 = arith.constant 0 : index
    %c0_3 = arith.constant 0 : index
    %3 = vector.load %arg3[%c0_2, %c0_3] : memref<456x64xbf16, #tpu.memory_space<vmem>>, vector<16x32xbf16>
    %c0_4 = arith.constant 0 : index
    %c0_5 = arith.constant 0 : index
    %4 = vector.load %arg4[%c0_4, %c0_5] : memref<456x1xf32, #tpu.memory_space<vmem>>, vector<16x1xf32>
    %cst = arith.constant dense<0.000000e+00> : vector<16x256xf32>
    %5 = tpu.matmul %3, %2, %cst {dimension_numbers = #tpu.dot_dimension_numbers<[1], [0], [0], [1], [0, 0, 1, 1], [], []>} : vector<16x32xbf16>, vector<32x256xbf16>, vector<16x256xf32> -> vector<16x256xf32>
    %6 = vector.broadcast %4 : vector<16x1xf32> to vector<16x256xf32>
    %7 = arith.addf %5, %6 : vector<16x256xf32>
    %cst_6 = arith.constant 0.000000e+00 : f32
    %8 = vector.broadcast %cst_6 : f32 to vector<16x256xf32>
    %9 = arith.maximumf %7, %8 : vector<16x256xf32>
    %10 = arith.truncf %9 : vector<16x256xf32> to vector<16x256xbf16>
    %c16 = arith.constant 16 : index
    %c0_7 = arith.constant 0 : index
    %11 = vector.load %arg3[%c16, %c0_7] : memref<456x64xbf16, #tpu.memory_space<vmem>>, vector<64x16xbf16>
    %c16_8 = arith.constant 16 : index
    %c0_9 = arith.constant 0 : index
    %12 = vector.load %arg4[%c16_8, %c0_9] : memref<456x1xf32, #tpu.memory_space<vmem>>, vector<64x1xf32>
    %cst_10 = arith.constant dense<0.000000e+00> : vector<64x256xf32>
    %13 = tpu.matmul %11, %10, %cst_10 {dimension_numbers = #tpu.dot_dimension_numbers<[1], [0], [0], [1], [0, 0, 1, 1], [], []>} : vector<64x16xbf16>, vector<16x256xbf16>, vector<64x256xf32> -> vector<64x256xf32>
    %14 = vector.broadcast %12 : vector<64x1xf32> to vector<64x256xf32>
    %15 = arith.addf %13, %14 : vector<64x256xf32>
    %cst_11 = arith.constant 0.000000e+00 : f32
    %16 = vector.broadcast %cst_11 : f32 to vector<64x256xf32>
    %17 = arith.maximumf %15, %16 : vector<64x256xf32>
    %18 = arith.truncf %17 : vector<64x256xf32> to vector<64x256xbf16>
    %c80 = arith.constant 80 : index
    %c0_12 = arith.constant 0 : index
    %19 = vector.load %arg3[%c80, %c0_12] : memref<456x64xbf16, #tpu.memory_space<vmem>>, vector<64x64xbf16>
    %c80_13 = arith.constant 80 : index
    %c0_14 = arith.constant 0 : index
    %20 = vector.load %arg4[%c80_13, %c0_14] : memref<456x1xf32, #tpu.memory_space<vmem>>, vector<64x1xf32>
    %cst_15 = arith.constant dense<0.000000e+00> : vector<64x256xf32>
    %21 = tpu.matmul %19, %18, %cst_15 {dimension_numbers = #tpu.dot_dimension_numbers<[1], [0], [0], [1], [0, 0, 1, 1], [], []>} : vector<64x64xbf16>, vector<64x256xbf16>, vector<64x256xf32> -> vector<64x256xf32>
    %22 = vector.broadcast %20 : vector<64x1xf32> to vector<64x256xf32>
    %23 = arith.addf %21, %22 : vector<64x256xf32>
    %cst_16 = arith.constant 0.000000e+00 : f32
    %24 = vector.broadcast %cst_16 : f32 to vector<64x256xf32>
    %25 = arith.maximumf %23, %24 : vector<64x256xf32>
    %26 = arith.truncf %25 : vector<64x256xf32> to vector<64x256xbf16>
    %c144 = arith.constant 144 : index
    %c0_17 = arith.constant 0 : index
    %27 = vector.load %arg3[%c144, %c0_17] : memref<456x64xbf16, #tpu.memory_space<vmem>>, vector<16x64xbf16>
    %c144_18 = arith.constant 144 : index
    %c0_19 = arith.constant 0 : index
    %28 = vector.load %arg4[%c144_18, %c0_19] : memref<456x1xf32, #tpu.memory_space<vmem>>, vector<16x1xf32>
    %cst_20 = arith.constant dense<0.000000e+00> : vector<16x256xf32>
    %29 = tpu.matmul %27, %26, %cst_20 {dimension_numbers = #tpu.dot_dimension_numbers<[1], [0], [0], [1], [0, 0, 1, 1], [], []>} : vector<16x64xbf16>, vector<64x256xbf16>, vector<16x256xf32> -> vector<16x256xf32>
    %30 = vector.broadcast %28 : vector<16x1xf32> to vector<16x256xf32>
    %31 = arith.addf %29, %30 : vector<16x256xf32>
    %32 = arith.addf %31, %9 : vector<16x256xf32>
    %cst_21 = arith.constant 0.000000e+00 : f32
    %33 = vector.broadcast %cst_21 : f32 to vector<16x256xf32>
    %34 = arith.maximumf %32, %33 : vector<16x256xf32>
    %35 = arith.truncf %34 : vector<16x256xf32> to vector<16x256xbf16>
    %c160 = arith.constant 160 : index
    %c0_22 = arith.constant 0 : index
    %36 = vector.load %arg3[%c160, %c0_22] : memref<456x64xbf16, #tpu.memory_space<vmem>>, vector<64x16xbf16>
    %c160_23 = arith.constant 160 : index
    %c0_24 = arith.constant 0 : index
    %37 = vector.load %arg4[%c160_23, %c0_24] : memref<456x1xf32, #tpu.memory_space<vmem>>, vector<64x1xf32>
    %cst_25 = arith.constant dense<0.000000e+00> : vector<64x256xf32>
    %38 = tpu.matmul %36, %35, %cst_25 {dimension_numbers = #tpu.dot_dimension_numbers<[1], [0], [0], [1], [0, 0, 1, 1], [], []>} : vector<64x16xbf16>, vector<16x256xbf16>, vector<64x256xf32> -> vector<64x256xf32>
    %39 = vector.broadcast %37 : vector<64x1xf32> to vector<64x256xf32>
    %40 = arith.addf %38, %39 : vector<64x256xf32>
    %cst_26 = arith.constant 0.000000e+00 : f32
    %41 = vector.broadcast %cst_26 : f32 to vector<64x256xf32>
    %42 = arith.maximumf %40, %41 : vector<64x256xf32>
    %43 = arith.truncf %42 : vector<64x256xf32> to vector<64x256xbf16>
    %c224 = arith.constant 224 : index
    %c0_27 = arith.constant 0 : index
    %44 = vector.load %arg3[%c224, %c0_27] : memref<456x64xbf16, #tpu.memory_space<vmem>>, vector<64x64xbf16>
    %c224_28 = arith.constant 224 : index
    %c0_29 = arith.constant 0 : index
    %45 = vector.load %arg4[%c224_28, %c0_29] : memref<456x1xf32, #tpu.memory_space<vmem>>, vector<64x1xf32>
    %cst_30 = arith.constant dense<0.000000e+00> : vector<64x256xf32>
    %46 = tpu.matmul %44, %43, %cst_30 {dimension_numbers = #tpu.dot_dimension_numbers<[1], [0], [0], [1], [0, 0, 1, 1], [], []>} : vector<64x64xbf16>, vector<64x256xbf16>, vector<64x256xf32> -> vector<64x256xf32>
    %47 = vector.broadcast %45 : vector<64x1xf32> to vector<64x256xf32>
    %48 = arith.addf %46, %47 : vector<64x256xf32>
    %cst_31 = arith.constant 0.000000e+00 : f32
    %49 = vector.broadcast %cst_31 : f32 to vector<64x256xf32>
    %50 = arith.maximumf %48, %49 : vector<64x256xf32>
    %51 = arith.truncf %50 : vector<64x256xf32> to vector<64x256xbf16>
    %c288 = arith.constant 288 : index
    %c0_32 = arith.constant 0 : index
    %52 = vector.load %arg3[%c288, %c0_32] : memref<456x64xbf16, #tpu.memory_space<vmem>>, vector<16x64xbf16>
    %c288_33 = arith.constant 288 : index
    %c0_34 = arith.constant 0 : index
    %53 = vector.load %arg4[%c288_33, %c0_34] : memref<456x1xf32, #tpu.memory_space<vmem>>, vector<16x1xf32>
    %cst_35 = arith.constant dense<0.000000e+00> : vector<16x256xf32>
    %54 = tpu.matmul %52, %51, %cst_35 {dimension_numbers = #tpu.dot_dimension_numbers<[1], [0], [0], [1], [0, 0, 1, 1], [], []>} : vector<16x64xbf16>, vector<64x256xbf16>, vector<16x256xf32> -> vector<16x256xf32>
    %55 = vector.broadcast %53 : vector<16x1xf32> to vector<16x256xf32>
    %56 = arith.addf %54, %55 : vector<16x256xf32>
    %57 = arith.addf %56, %34 : vector<16x256xf32>
    %cst_36 = arith.constant 0.000000e+00 : f32
    %58 = vector.broadcast %cst_36 : f32 to vector<16x256xf32>
    %59 = arith.maximumf %57, %58 : vector<16x256xf32>
    %60 = arith.truncf %59 : vector<16x256xf32> to vector<16x256xbf16>
    %c304 = arith.constant 304 : index
    %c0_37 = arith.constant 0 : index
    %61 = vector.load %arg3[%c304, %c0_37] : memref<456x64xbf16, #tpu.memory_space<vmem>>, vector<64x16xbf16>
    %c304_38 = arith.constant 304 : index
    %c0_39 = arith.constant 0 : index
    %62 = vector.load %arg4[%c304_38, %c0_39] : memref<456x1xf32, #tpu.memory_space<vmem>>, vector<64x1xf32>
    %cst_40 = arith.constant dense<0.000000e+00> : vector<64x256xf32>
    %63 = tpu.matmul %61, %60, %cst_40 {dimension_numbers = #tpu.dot_dimension_numbers<[1], [0], [0], [1], [0, 0, 1, 1], [], []>} : vector<64x16xbf16>, vector<16x256xbf16>, vector<64x256xf32> -> vector<64x256xf32>
    %64 = vector.broadcast %62 : vector<64x1xf32> to vector<64x256xf32>
    %65 = arith.addf %63, %64 : vector<64x256xf32>
    %cst_41 = arith.constant 0.000000e+00 : f32
    %66 = vector.broadcast %cst_41 : f32 to vector<64x256xf32>
    %67 = arith.maximumf %65, %66 : vector<64x256xf32>
    %68 = arith.truncf %67 : vector<64x256xf32> to vector<64x256xbf16>
    %c368 = arith.constant 368 : index
    %c0_42 = arith.constant 0 : index
    %69 = vector.load %arg3[%c368, %c0_42] : memref<456x64xbf16, #tpu.memory_space<vmem>>, vector<64x64xbf16>
    %c368_43 = arith.constant 368 : index
    %c0_44 = arith.constant 0 : index
    %70 = vector.load %arg4[%c368_43, %c0_44] : memref<456x1xf32, #tpu.memory_space<vmem>>, vector<64x1xf32>
    %cst_45 = arith.constant dense<0.000000e+00> : vector<64x256xf32>
    %71 = tpu.matmul %69, %68, %cst_45 {dimension_numbers = #tpu.dot_dimension_numbers<[1], [0], [0], [1], [0, 0, 1, 1], [], []>} : vector<64x64xbf16>, vector<64x256xbf16>, vector<64x256xf32> -> vector<64x256xf32>
    %72 = vector.broadcast %70 : vector<64x1xf32> to vector<64x256xf32>
    %73 = arith.addf %71, %72 : vector<64x256xf32>
    %cst_46 = arith.constant 0.000000e+00 : f32
    %74 = vector.broadcast %cst_46 : f32 to vector<64x256xf32>
    %75 = arith.maximumf %73, %74 : vector<64x256xf32>
    %76 = arith.truncf %75 : vector<64x256xf32> to vector<64x256xbf16>
    %c432 = arith.constant 432 : index
    %c0_47 = arith.constant 0 : index
    %77 = vector.load %arg3[%c432, %c0_47] : memref<456x64xbf16, #tpu.memory_space<vmem>>, vector<16x64xbf16>
    %c432_48 = arith.constant 432 : index
    %c0_49 = arith.constant 0 : index
    %78 = vector.load %arg4[%c432_48, %c0_49] : memref<456x1xf32, #tpu.memory_space<vmem>>, vector<16x1xf32>
    %cst_50 = arith.constant dense<0.000000e+00> : vector<16x256xf32>
    %79 = tpu.matmul %77, %76, %cst_50 {dimension_numbers = #tpu.dot_dimension_numbers<[1], [0], [0], [1], [0, 0, 1, 1], [], []>} : vector<16x64xbf16>, vector<64x256xbf16>, vector<16x256xf32> -> vector<16x256xf32>
    %80 = vector.broadcast %78 : vector<16x1xf32> to vector<16x256xf32>
    %81 = arith.addf %79, %80 : vector<16x256xf32>
    %82 = arith.addf %81, %59 : vector<16x256xf32>
    %cst_51 = arith.constant 0.000000e+00 : f32
    %83 = vector.broadcast %cst_51 : f32 to vector<16x256xf32>
    %84 = arith.maximumf %82, %83 : vector<16x256xf32>
    %c448 = arith.constant 448 : index
    %c0_52 = arith.constant 0 : index
    %85 = vector.load %arg3[%c448, %c0_52] : memref<456x64xbf16, #tpu.memory_space<vmem>>, vector<8x16xbf16>
    %c448_53 = arith.constant 448 : index
    %c0_54 = arith.constant 0 : index
    %86 = vector.load %arg4[%c448_53, %c0_54] : memref<456x1xf32, #tpu.memory_space<vmem>>, vector<8x1xf32>
    %87 = arith.truncf %84 : vector<16x256xf32> to vector<16x256xbf16>
    %cst_55 = arith.constant dense<0.000000e+00> : vector<8x256xf32>
    %88 = tpu.matmul %85, %87, %cst_55 {dimension_numbers = #tpu.dot_dimension_numbers<[1], [0], [0], [1], [0, 0, 1, 1], [], []>} : vector<8x16xbf16>, vector<16x256xbf16>, vector<8x256xf32> -> vector<8x256xf32>
    %89 = vector.broadcast %86 : vector<8x1xf32> to vector<8x256xf32>
    %90 = arith.addf %88, %89 : vector<8x256xf32>
    %91 = vector.extract_strided_slice %90 {offsets = [0, 0], sizes = [3, 256], strides = [1, 1]} : vector<8x256xf32> to vector<3x256xf32>
    %c0_56 = arith.constant 0 : index
    %c0_57 = arith.constant 0 : index
    %c0_58 = arith.constant 0 : index
    %92 = vector.load %arg5[%c0_56, %c0_57, %c0_58] : memref<1x3x256xf32, #tpu.memory_space<vmem>>, vector<1x3x256xf32>
    %93 = vector.shape_cast %92 : vector<1x3x256xf32> to vector<3x256xf32>
    %94 = vector.shape_cast %91 : vector<3x256xf32> to vector<1x3x256xf32>
    tpu.vector_store %arg5[%c0_56, %c0_57, %c0_58], %94 {strides = array<i32>} : memref<1x3x256xf32, #tpu.memory_space<vmem>>, vector<1x3x256xf32>,
    %c0_59 = arith.constant 0 : index
    %c0_60 = arith.constant 0 : index
    %c0_61 = arith.constant 0 : index
    %95 = vector.load %arg6[%c0_59, %c0_60, %c0_61] : memref<1x16x256xf32, #tpu.memory_space<vmem>>, vector<1x16x256xf32>
    %96 = vector.shape_cast %95 : vector<1x16x256xf32> to vector<16x256xf32>
    %97 = vector.shape_cast %84 : vector<16x256xf32> to vector<1x16x256xf32>
    tpu.vector_store %arg6[%c0_59, %c0_60, %c0_61], %97 {strides = array<i32>} : memref<1x16x256xf32, #tpu.memory_space<vmem>>, vector<1x16x256xf32>,
    return
  }
  func.func @transform_0(%arg0: i32, %arg1: i32) -> (i32, i32, i32) {
    %c0_i32 = arith.constant 0 : i32
    %c0_i32_0 = arith.constant 0 : i32
    return %arg0, %c0_i32, %arg1 : i32, i32, i32
  }
  func.func @transform_1(%arg0: i32, %arg1: i32) -> (i32, i32) {
    %c0_i32 = arith.constant 0 : i32
    %c0_i32_0 = arith.constant 0 : i32
    %c0_i32_1 = arith.constant 0 : i32
    return %c0_i32, %c0_i32_0 : i32, i32
  }
  func.func @transform_2(%arg0: i32, %arg1: i32) -> (i32, i32) {
    %c0_i32 = arith.constant 0 : i32
    %c0_i32_0 = arith.constant 0 : i32
    %c0_i32_1 = arith.constant 0 : i32
    return %c0_i32, %c0_i32_0 : i32, i32
  }
  func.func @transform_3(%arg0: i32, %arg1: i32) -> (i32, i32, i32) {
    %c0_i32 = arith.constant 0 : i32
    %c0_i32_0 = arith.constant 0 : i32
    return %arg0, %c0_i32, %arg1 : i32, i32, i32
  }
  func.func @transform_4(%arg0: i32, %arg1: i32) -> (i32, i32, i32) {
    %c0_i32 = arith.constant 0 : i32
    %c0_i32_0 = arith.constant 0 : i32
    return %arg0, %c0_i32, %arg1 : i32, i32, i32
  }
}

</mosaic_0001>

<llo_original>
// kernel: tpu_custom_call.1
$region0: #{tpu_custom_call.1}
  #allocation0 [shape = 'u32[]', space=smem, size = 0x4, offset = 0x4, fixed_abs, tag = 'smem constant byte address 0x4 - core index']
  #allocation1 [shape = 'u32[144,128]{1,0:T(1,128)}', space=vmem, size = 0x12000, scoped, tag = 'internal scratch']
  %s0 = inlined_call_operand.vmem [shape: f32[2,32,256], index: 0, kind: input, shape index: {}]
  %s1 = inlined_call_operand.vmem [shape: bf16[456,64], index: 1, kind: input, shape index: {}]
  %s2 = inlined_call_operand.vmem [shape: f32[456,1], index: 2, kind: input, shape index: {}]
  %s3 = inlined_call_operand.vmem [shape: f32[2,3,256], index: 3, kind: output, shape index: {0}]
  %s4 = inlined_call_operand.hbm [shape: f32[2,16,256], index: 4, kind: output, shape index: {1}]
  %5 = xla_tuple %s3, %s4
  %s6 = sld [smem:[#allocation0]]
  $region53: #{tpu_custom_call.1} parent=0
    _
  %s8 = ssub.s32 1, %s6
  %s9 = scalar_select 0, %s8, %s6
  $region1: #{tpu_custom_call.1} parent=0
    #allocation2 [shape = 'u8[32768]{0}', space=vmem, size = 0x8000, scoped, tag = 'output window, operand 1']
    #allocation3 [shape = 's32[2]{0}', space=sflag, size = 0x8, scoped, tag = 'scoped memory for tpu_custom_call.1']
    %10 = vsyncpa [#allocation3], 0
    %s11 = scalar_lea.sflag [#allocation3], 1
    %12 = vsyncpa %s11, 0
    loop: start=0, step=1, limit=4
    $region2: #{tpu_custom_call.1} parent=1 // loop_pre_header
      _
    $region3: #{tpu_custom_call.1} parent=1 // loop_header
      %s14 = sphi 0, %s18
      %p15 = scmp.ge.s32.totalorder %s14, 4
      %s21 = sphi 0, %s33
      %s22 = sphi 0, %s29
      %s23 = sphi 0, %s21
      %s24 = sphi 0, %s22
      %s25 = sphi 0, %s23
      %s26 = sphi 0, %s24
      %s38 = sphi 0, %s40
      %s41 = sphi 0, %s38
      %s42 = sphi 0, %s41
      %s58 = sphi 0, %s42
      %s62 = sphi 0, %s62
      %s64 = sphi 0, %s62
      %s65 = sphi 0, %s64
      %s79 = sphi 0, %s65
      %s83 = sphi 0, %s83
      %s85 = sphi 0, %s83
      %s86 = sphi 0, %s85
      %s100 = sphi 0, %s86
      %s108 = sphi 0, %s110
      %s111 = sphi 0, %s108
      %s112 = sphi 0, %s111
      %s128 = sphi 0, %s112
      %s136 = sphi 0, %s138
      %s139 = sphi 0, %s136
      %s140 = sphi 0, %s139
      %s156 = sphi 0, %s140
    $region4: #{tpu_custom_call.1} parent=1 // loop_header_branch
      %17 = sbr.rel (%p15) target = $region8
    $region5: #{tpu_custom_call.1} parent=1 // loop_body
      %s19 = ssub.s32 %s14, 1
      %s20 = ssub.s32 %s14, 2
      %s27 = sadd.s32 1, %s22
      %p28 = scmp.ge.s32.totalorder %s27, 1
      %s29 = scalar_select %p28, 0, %s27
      %s30 = sadd.s32 1, %s21
      %s31 = scalar_select %p28, %s30, %s21
      %p32 = scmp.ge.s32.totalorder %s31, 2
      %s33 = scalar_select %p32, 0, %s31
      %s34 = ssub.s32 %s21, %s33
      %s35 = ssub.s32 %s22, %s29
      %s36 = sor.u32 %s34, %s35
      %p37 = scmp.eq.s32.totalorder %s36, 0
      %s39 = sadd.s32 %s38, 1
      %s40 = scalar_select %p37, %s38, %s39
      %p43 = pneg %p37
      %p44 = scmp.eq.s32.totalorder %s14, 1
      %p45 = por %p43, %p44
      %p46 = scmp.ne.s32.totalorder %s38, %s41
      %p47 = scmp.eq.s32.totalorder %s14, 0
      %p48 = por %p46, %p47
      %p49 = scmp.ne.s32.totalorder %s38, %s41
      %p50 = scmp.eq.s32.totalorder %s19, 1
      %p51 = por %p49, %p50
      %p52 = scmp.ne.s32.totalorder %s41, %s42
      %p53 = scmp.eq.s32.totalorder %s19, 0
      %p54 = por %p52, %p53
      %p55 = scmp.ne.s32.totalorder %s41, %s42
      %p56 = scmp.eq.s32.totalorder %s20, 1
      %p57 = por %p55, %p56
      %p59 = scmp.ne.s32.totalorder %s42, %s58
      %p60 = scmp.eq.s32.totalorder %s20, 0
      %p61 = por %p59, %p60
      %s63 = sadd.s32 %s62, 1
      %p66 = scmp.eq.s32.totalorder %s14, 1
      %p67 = scmp.ne.s32.totalorder %s62, %s64
      %p68 = scmp.eq.s32.totalorder %s14, 0
      %p69 = por %p67, %p68
      %p70 = scmp.ne.s32.totalorder %s62, %s64
      %p71 = scmp.eq.s32.totalorder %s19, 1
      %p72 = por %p70, %p71
      %p73 = scmp.ne.s32.totalorder %s64, %s65
      %p74 = scmp.eq.s32.totalorder %s19, 0
      %p75 = por %p73, %p74
      %p76 = scmp.ne.s32.totalorder %s64, %s65
      %p77 = scmp.eq.s32.totalorder %s20, 1
      %p78 = por %p76, %p77
      %p80 = scmp.ne.s32.totalorder %s65, %s79
      %p81 = scmp.eq.s32.totalorder %s20, 0
      %p82 = por %p80, %p81
      %s84 = sadd.s32 %s83, 1
      %p87 = scmp.eq.s32.totalorder %s14, 1
      %p88 = scmp.ne.s32.totalorder %s83, %s85
      %p89 = scmp.eq.s32.totalorder %s14, 0
      %p90 = por %p88, %p89
      %p91 = scmp.ne.s32.totalorder %s83, %s85
      %p92 = scmp.eq.s32.totalorder %s19, 1
      %p93 = por %p91, %p92
      %p94 = scmp.ne.s32.totalorder %s85, %s86
      %p95 = scmp.eq.s32.totalorder %s19, 0
      %p96 = por %p94, %p95
      %p97 = scmp.ne.s32.totalorder %s85, %s86
      %p98 = scmp.eq.s32.totalorder %s20, 1
      %p99 = por %p97, %p98
      %p101 = scmp.ne.s32.totalorder %s86, %s100
      %p102 = scmp.eq.s32.totalorder %s20, 0
      %p103 = por %p101, %p102
      %s104 = ssub.s32 %s21, %s33
      %s105 = ssub.s32 %s22, %s29
      %s106 = sor.u32 %s104, %s105
      %p107 = scmp.eq.s32.totalorder %s106, 0
      %s109 = sadd.s32 %s108, 1
      %s110 = scalar_select %p107, %s108, %s109
      %p113 = pneg %p107
      %p114 = scmp.eq.s32.totalorder %s14, 1
      %p115 = por %p113, %p114
      %p116 = scmp.ne.s32.totalorder %s108, %s111
      %p117 = scmp.eq.s32.totalorder %s14, 0
      %p118 = por %p116, %p117
      %p119 = scmp.ne.s32.totalorder %s108, %s111
      %p120 = scmp.eq.s32.totalorder %s19, 1
      %p121 = por %p119, %p120
      %p122 = scmp.ne.s32.totalorder %s111, %s112
      %p123 = scmp.eq.s32.totalorder %s19, 0
      %p124 = por %p122, %p123
      %p125 = scmp.ne.s32.totalorder %s111, %s112
      %p126 = scmp.eq.s32.totalorder %s20, 1
      %p127 = por %p125, %p126
      %p129 = scmp.ne.s32.totalorder %s112, %s128
      %p130 = scmp.eq.s32.totalorder %s20, 0
      %p131 = por %p129, %p130
      %s132 = ssub.s32 %s21, %s33
      %s133 = ssub.s32 %s22, %s29
      %s134 = sor.u32 %s132, %s133
      %p135 = scmp.eq.s32.totalorder %s134, 0
      %s137 = sadd.s32 %s136, 1
      %s138 = scalar_select %p135, %s136, %s137
      %p141 = pneg %p135
      %p142 = scmp.eq.s32.totalorder %s14, 1
      %p143 = por %p141, %p142
      %p144 = scmp.ne.s32.totalorder %s136, %s139
      %p145 = scmp.eq.s32.totalorder %s14, 0
      %p146 = por %p144, %p145
      %p147 = scmp.ne.s32.totalorder %s136, %s139
      %p148 = scmp.eq.s32.totalorder %s19, 1
      %p149 = por %p147, %p148
      %p150 = scmp.ne.s32.totalorder %s139, %s140
      %p151 = scmp.eq.s32.totalorder %s19, 0
      %p152 = por %p150, %p151
      %p153 = scmp.ne.s32.totalorder %s139, %s140
      %p154 = scmp.eq.s32.totalorder %s20, 1
      %p155 = por %p153, %p154
      %p157 = scmp.ne.s32.totalorder %s140, %s156
      %p158 = scmp.eq.s32.totalorder %s20, 0
      %p159 = por %p157, %p158
      %p160 = scmp.le.s32.totalorder 1, %s14
      %p161 = scmp.lt.s32.totalorder %s14, 3
      %p162 = pnand %p160, %p161
      %p163 = pneg %p162
      // Predicated region
      $region9: #{tpu_custom_call.1} parent=5 // pred_check
        _
      $region10: #{tpu_custom_call.1} parent=5 // pred_check_branch
        %165 = sbr.rel (%p162) target = $region12
      $region11: #{tpu_custom_call.1} parent=5 // pred_region
        %s166 = ssub.s32 %s14, 1
        // Predicated region
        $region13: #{tpu_custom_call.1} parent=11 // pred_check
          %p167 = pneg %p75
        $region14: #{tpu_custom_call.1} parent=11 // pred_check_branch
          %169 = sbr.rel (%p167) target = $region16
        $region15: #{tpu_custom_call.1} parent=11 // pred_region
          _
        $region16: #{tpu_custom_call.1} parent=11 // pred_fallthru
          _
        // Predicated region
        $region17: #{tpu_custom_call.1} parent=11 // pred_check
          %p170 = pneg %p96
        $region18: #{tpu_custom_call.1} parent=11 // pred_check_branch
          %172 = sbr.rel (%p170) target = $region20
        $region19: #{tpu_custom_call.1} parent=11 // pred_region
          _
        $region20: #{tpu_custom_call.1} parent=11 // pred_fallthru
          _
      $region12: #{tpu_custom_call.1} parent=5 // pred_fallthru
        _
      %p173 = scmp.lt.s32.totalorder %s14, 2
      // Predicated region
      $region21: #{tpu_custom_call.1} parent=5 // pred_check
        %p174 = pneg %p173
      $region22: #{tpu_custom_call.1} parent=5 // pred_check_branch
        %176 = sbr.rel (%p174) target = $region24
      $region23: #{tpu_custom_call.1} parent=5 // pred_region
        // Predicated region
        $region25: #{tpu_custom_call.1} parent=23 // pred_check
          %p177 = pneg %p48
        $region26: #{tpu_custom_call.1} parent=23 // pred_check_branch
          %179 = sbr.rel (%p177) target = $region28
        $region27: #{tpu_custom_call.1} parent=23 // pred_region
          %s180 = smul.u32 2, %s22
          %p181 = scmp.lt.s32.totalorder %s21, 1
          %s182 = scalar_select %p181, %s21, 1
          %p183 = scmp.lt.s32.totalorder %s180, 1
          %s184 = scalar_select %p183, %s180, 1
          %s185 = smul.addr %s182, 8
          %s186 = sadd.s32 %s184, %s185
          %s187 = smul.addr %s186, 8
          %s188 = scalar_lea.vmem %s0, %s187
          %s189 = smul.u32 2, %s22
        $region28: #{tpu_custom_call.1} parent=23 // pred_fallthru
          _
      $region24: #{tpu_custom_call.1} parent=5 // pred_fallthru
        _
      %p190 = scmp.le.s32.totalorder 1, %s14
      %p191 = scmp.lt.s32.totalorder %s14, 3
      %p192 = pnand %p190, %p191
      %p193 = pneg %p192
      // Predicated region
      $region29: #{tpu_custom_call.1} parent=5 // pred_check
        _
      $region30: #{tpu_custom_call.1} parent=5 // pred_check_branch
        %195 = sbr.rel (%p192) target = $region32
      $region31: #{tpu_custom_call.1} parent=5 // pred_region
        %s196 = ssub.s32 %s14, 1
        %s197 = smul.u32 2, %s24
        %p198 = scmp.lt.s32.totalorder %s23, 1
        %s199 = scalar_select %p198, %s23, 1
        %p200 = scmp.lt.s32.totalorder %s197, 1
        %s201 = scalar_select %p200, %s197, 1
        %s202 = smul.addr %s199, 8
        %s203 = sadd.s32 %s201, %s202
        %s204 = smul.addr %s203, 8
        %s205 = scalar_lea.vmem %s0, %s204
        %p206 = pneg %p54
        %p207 = pneg %p51
        %p208 = pneg %p75
        %p209 = pneg %p72
        %p210 = pneg %p96
        %p211 = pneg %p93
        %p212 = pneg %p124
        %p213 = pneg %p121
        %s214 = smul.u32 2, %s24
        %p215 = scmp.lt.s32.totalorder %s23, 1
        %s216 = scalar_select %p215, %s23, 1
        %p217 = scmp.lt.s32.totalorder %s214, 1
        %s218 = scalar_select %p217, %s214, 1
        %s219 = smul.addr %s216, 2
        %s220 = sadd.s32 %s218, %s219
        %s221 = smul.addr %s220, 4
        %s222 = scalar_lea.vmem %s3, %s221
        %p223 = pneg %p152
        %p224 = pneg %p149
        %s225 = sand.u32 %s139, 1
        %s226 = scalar_lea.sflag [#allocation3], %s225
        %s227 = sand.u32 %s139, 1
        %s228 = smul.addr %s227, 32
        %s229 = scalar_lea.vmem [#allocation2], %s228
        %s230 = smul.u32 2, %s24
        %p231 = scmp.lt.s32.totalorder %s23, 1
        %s232 = scalar_select %p231, %s23, 1
        %p233 = scmp.lt.s32.totalorder %s230, 1
        %s234 = scalar_select %p233, %s230, 1
        %s235 = smul.addr %s232, 8
        %s236 = sadd.s32 %s234, %s235
        %s237 = smul.addr %s236, 8
        %s238 = scalar_lea.vmem %s0, %s237
        %s239 = smul.u32 2, %s24
        %s240 = smul.u32 2, %s24
        %p241 = scmp.lt.s32.totalorder %s23, 1
        %s242 = scalar_select %p241, %s23, 1
        %p243 = scmp.lt.s32.totalorder %s240, 1
        %s244 = scalar_select %p243, %s240, 1
        %s245 = smul.addr %s242, 2
        %s246 = sadd.s32 %s244, %s245
        %s247 = smul.addr %s246, 4
        %s248 = scalar_lea.vmem %s3, %s247
        %s249 = smul.u32 2, %s24
        %s250 = smul.u32 2, %s24
        %v252 = vld [vmem:[%s238] sm:$0xff]
        %v253 = vld [vmem:[%s238 + $0x8] sm:$0xff]
        %v254 = vld [vmem:[%s238 + $0x10] sm:$0xff]
        %v255 = vld [vmem:[%s238 + $0x18] sm:$0xff]
        %v256 = vld [vmem:[%s238 + $0x20] sm:$0xff]
        %v257 = vld [vmem:[%s238 + $0x28] sm:$0xff]
        %v258 = vld [vmem:[%s238 + $0x30] sm:$0xff]
        %v259 = vld [vmem:[%s238 + $0x38] sm:$0xff]
        %v260 = vpack.c.bf16 %v254, %v252
        %v261 = vpack.c.bf16 %v255, %v253
        %v262 = vpack.c.bf16 %v258, %v256
        %v263 = vpack.c.bf16 %v259, %v257
        %v264 = vld [vmem:[%s1] sm:$0xf]
        %v265 = vld [vmem:[%s1 + $0x4] sm:$0xf]
        %v266 = vld [vmem:[%s2] sm:$0xff]
        %v267 = vld [vmem:[%s2 + $0x8] sm:$0xff]
        %269 = vset.pattern.permute.xlu0 0
        %270 = vperm.xlu0 %269, %v266
        %v271 = vpop.permute.xlu0 %270
        %274 = vset.pattern.permute.xlu0 0
        %275 = vperm.xlu0 %274, %v267
        %v276 = vpop.permute.xlu0 %275
        %v280 = vunpack.c.l.b16 %v264
        %v281 = vunpack.c.l.b16 %v265
        %v282 = vpack.c.b16 %v281, %v280
        %vm283 = vcmask 261120
        %v285 = vsel %vm283, %v282, 0
        %287 = vmatprep.subr.bf16.mxu0 %v261
        %288 = vmatpush1.bf16.msra.mxu0 %v260
        %289 = vmatprep.subr.bf16.mxu0 %v263
        %290 = vmatpush1.bf16.msra.mxu0 %v262
        %291 = vmatprep.subr.bf16.mxu0 0
        %292 = vmatpush1.bf16.msra.mxu0 0
        %293 = vmatprep.subr.bf16.mxu0 0
        %294 = vmatpush1.bf16.msra.mxu0 0
        %295 = vmatprep.subr.bf16.mxu0 0
        %296 = vmatpush1.bf16.msra.mxu0 0
        %297 = vmatprep.subr.bf16.mxu0 0
        %298 = vmatpush1.bf16.msra.mxu0 0
        %299 = vmatprep.subr.bf16.mxu0 0
        %300 = vmatpush1.bf16.msra.mxu0 0
        %301 = vmatprep.subr.bf16.mxu0 0
        %302 = vmatpush1.bf16.msra.mxu0 0
        %303 = vmatprep.subr.bf16.mxu0 0
        %304 = vmatpush1.bf16.msra.mxu0 0
        %305 = vmatprep.subr.bf16.mxu0 0
        %306 = vmatpush1.bf16.msra.mxu0 0
        %307 = vmatprep.subr.bf16.mxu0 0
        %308 = vmatpush1.bf16.msra.mxu0 0
        %309 = vmatprep.subr.bf16.mxu0 0
        %310 = vmatpush1.bf16.msra.mxu0 0
        %311 = vmatprep.subr.bf16.mxu0 0
        %312 = vmatpush1.bf16.msra.mxu0 0
        %313 = vmatprep.subr.bf16.mxu0 0
        %314 = vmatpush1.bf16.msra.mxu0 0
        %315 = vmatprep.subr.bf16.mxu0 0
        %316 = vmatpush1.bf16.msra.mxu0 0
        %317 = vmatprep.subr.bf16.mxu0 0
        %318 = vmatpush1.bf16.msra.mxu0 0
        %319 = vmatprep.mubr.bf16.mxu0 0
        %320 = vmatmul.mubr.bf16.gmra.mrb[0].mxu0 %v285
        %v321 = vpop.f32.mrb[0].mxu0
        %v322 = vadd.f32 %v271, %v321
        %v323 = vpop.f32.mrb[0].mxu0
        %v324 = vadd.f32 %v271, %v323
        %v325 = vpop.f32.mrb[0].mxu0
        %v326 = vadd.f32 %v276, %v325
        %v327 = vpop.f32.mrb[0].mxu0
        %v328 = vadd.f32 %v276, %v327
        %329 = vdwg.mxu0
        %v330 = vmax.f32 %v322, 0.0
        %v331 = vmax.f32 %v324, 0.0
        %v332 = vmax.f32 %v326, 0.0
        %v333 = vmax.f32 %v328, 0.0
        %v334 = vpack.c.bf16 %v332, %v330
        %v335 = vpack.c.bf16 %v333, %v331
        %v336 = vld [vmem:[%s1 + $0x8] sm:$0xf]
        %v337 = vld [vmem:[%s1 + $0xc] sm:$0xf]
        %v338 = vld [vmem:[%s1 + $0x10] sm:$0xf]
        %v339 = vld [vmem:[%s1 + $0x14] sm:$0xf]
        %v340 = vld [vmem:[%s1 + $0x18] sm:$0xf]
        %v341 = vld [vmem:[%s1 + $0x1c] sm:$0xf]
        %v342 = vld [vmem:[%s1 + $0x20] sm:$0xf]
        %v343 = vld [vmem:[%s1 + $0x24] sm:$0xf]
        %v344 = vld [vmem:[%s2 + $0x10] sm:$0xff]
        %v345 = vld [vmem:[%s2 + $0x18] sm:$0xff]
        %v346 = vld [vmem:[%s2 + $0x20] sm:$0xff]
        %v347 = vld [vmem:[%s2 + $0x28] sm:$0xff]
        %v348 = vld [vmem:[%s2 + $0x30] sm:$0xff]
        %v349 = vld [vmem:[%s2 + $0x38] sm:$0xff]
        %v350 = vld [vmem:[%s2 + $0x40] sm:$0xff]
        %v351 = vld [vmem:[%s2 + $0x48] sm:$0xff]
        %353 = vset.pattern.permute.xlu0 0
        %354 = vperm.xlu0 %353, %v344
        %v355 = vpop.permute.xlu0 %354
        %358 = vset.pattern.permute.xlu0 0
        %359 = vperm.xlu0 %358, %v345
        %v360 = vpop.permute.xlu0 %359
        %363 = vset.pattern.permute.xlu0 0
        %364 = vperm.xlu0 %363, %v346
        %v365 = vpop.permute.xlu0 %364
        %368 = vset.pattern.permute.xlu0 0
        %369 = vperm.xlu0 %368, %v347
        %v370 = vpop.permute.xlu0 %369
        %373 = vset.pattern.permute.xlu0 0
        %374 = vperm.xlu0 %373, %v348
        %v375 = vpop.permute.xlu0 %374
        %378 = vset.pattern.permute.xlu0 0
        %379 = vperm.xlu0 %378, %v349
        %v380 = vpop.permute.xlu0 %379
        %383 = vset.pattern.permute.xlu0 0
        %384 = vperm.xlu0 %383, %v350
        %v385 = vpop.permute.xlu0 %384
        %388 = vset.pattern.permute.xlu0 0
        %389 = vperm.xlu0 %388, %v351
        %v390 = vpop.permute.xlu0 %389
        %v400 = vunpack.c.l.b16 %v336
        %v401 = vunpack.c.l.b16 %v337
        %v402 = vunpack.c.l.b16 %v338
        %v403 = vunpack.c.l.b16 %v339
        %v404 = vunpack.c.l.b16 %v340
        %v405 = vunpack.c.l.b16 %v341
        %v406 = vunpack.c.l.b16 %v342
        %v407 = vunpack.c.l.b16 %v343
        %v408 = vpack.c.b16 %v401, %v400
        %v409 = vpack.c.b16 %v403, %v402
        %v410 = vpack.c.b16 %v405, %v404
        %v411 = vpack.c.b16 %v407, %v406
        %vm412 = vcmask 130048
        %v414 = vsel %vm412, %v408, 0
        %v417 = vsel %vm412, %v409, 0
        %v420 = vsel %vm412, %v410, 0
        %v423 = vsel %vm412, %v411, 0
        %425 = vmatprep.subr.bf16.mxu0 %v335
        %426 = vmatpush1.bf16.msra.mxu0 %v334
        %427 = vmatprep.subr.bf16.mxu0 0
        %428 = vmatpush1.bf16.msra.mxu0 0
        %429 = vmatprep.subr.bf16.mxu0 0
        %430 = vmatpush1.bf16.msra.mxu0 0
        %431 = vmatprep.subr.bf16.mxu0 0
        %432 = vmatpush1.bf16.msra.mxu0 0
        %433 = vmatprep.subr.bf16.mxu0 0
        %434 = vmatpush1.bf16.msra.mxu0 0
        %435 = vmatprep.subr.bf16.mxu0 0
        %436 = vmatpush1.bf16.msra.mxu0 0
        %437 = vmatprep.subr.bf16.mxu0 0
        %438 = vmatpush1.bf16.msra.mxu0 0
        %439 = vmatprep.subr.bf16.mxu0 0
        %440 = vmatpush1.bf16.msra.mxu0 0
        %441 = vmatprep.subr.bf16.mxu0 0
        %442 = vmatpush1.bf16.msra.mxu0 0
        %443 = vmatprep.subr.bf16.mxu0 0
        %444 = vmatpush1.bf16.msra.mxu0 0
        %445 = vmatprep.subr.bf16.mxu0 0
        %446 = vmatpush1.bf16.msra.mxu0 0
        %447 = vmatprep.subr.bf16.mxu0 0
        %448 = vmatpush1.bf16.msra.mxu0 0
        %449 = vmatprep.subr.bf16.mxu0 0
        %450 = vmatpush1.bf16.msra.mxu0 0
        %451 = vmatprep.subr.bf16.mxu0 0
        %452 = vmatpush1.bf16.msra.mxu0 0
        %453 = vmatprep.subr.bf16.mxu0 0
        %454 = vmatpush1.bf16.msra.mxu0 0
        %455 = vmatprep.subr.bf16.mxu0 0
        %456 = vmatpush1.bf16.msra.mxu0 0
        %457 = vmatprep.mubr.bf16.mxu0 0
        %458 = vmatmul.mubr.bf16.gmra.mrb[0].mxu0 %v414
        %v459 = vpop.f32.mrb[0].mxu0
        %v460 = vadd.f32 %v355, %v459
        %v461 = vpop.f32.mrb[0].mxu0
        %v462 = vadd.f32 %v355, %v461
        %v463 = vpop.f32.mrb[0].mxu0
        %v464 = vadd.f32 %v360, %v463
        %v465 = vpop.f32.mrb[0].mxu0
        %v466 = vadd.f32 %v360, %v465
        %467 = vmatprep.mubr.bf16.mxu0 0
        %468 = vmatmul.mubr.bf16.gmra.mrb[0].mxu0 %v417
        %v469 = vpop.f32.mrb[0].mxu0
        %v470 = vadd.f32 %v365, %v469
        %v471 = vpop.f32.mrb[0].mxu0
        %v472 = vadd.f32 %v365, %v471
        %v473 = vpop.f32.mrb[0].mxu0
        %v474 = vadd.f32 %v370, %v473
        %v475 = vpop.f32.mrb[0].mxu0
        %v476 = vadd.f32 %v370, %v475
        %477 = vmatprep.mubr.bf16.mxu0 0
        %478 = vmatmul.mubr.bf16.gmra.mrb[0].mxu0 %v420
        %v479 = vpop.f32.mrb[0].mxu0
        %v480 = vadd.f32 %v375, %v479
        %v481 = vpop.f32.mrb[0].mxu0
        %v482 = vadd.f32 %v375, %v481
        %v483 = vpop.f32.mrb[0].mxu0
        %v484 = vadd.f32 %v380, %v483
        %v485 = vpop.f32.mrb[0].mxu0
        %v486 = vadd.f32 %v380, %v485
        %487 = vmatprep.mubr.bf16.mxu0 0
        %488 = vmatmul.mubr.bf16.gmra.mrb[0].mxu0 %v423
        %v489 = vpop.f32.mrb[0].mxu0
        %v490 = vadd.f32 %v385, %v489
        %v491 = vpop.f32.mrb[0].mxu0
        %v492 = vadd.f32 %v385, %v491
        %v493 = vpop.f32.mrb[0].mxu0
        %v494 = vadd.f32 %v390, %v493
        %v495 = vpop.f32.mrb[0].mxu0
        %v496 = vadd.f32 %v390, %v495
        %497 = vdwg.mxu0
        %v498 = vmax.f32 %v460, 0.0
        %v499 = vmax.f32 %v462, 0.0
        %v500 = vmax.f32 %v464, 0.0
        %v501 = vmax.f32 %v466, 0.0
        %v502 = vmax.f32 %v470, 0.0
        %v503 = vmax.f32 %v472, 0.0
        %v504 = vmax.f32 %v474, 0.0
        %v505 = vmax.f32 %v476, 0.0
        %v506 = vmax.f32 %v480, 0.0
        %v507 = vmax.f32 %v482, 0.0
        %v508 = vmax.f32 %v484, 0.0
        %v509 = vmax.f32 %v486, 0.0
        %v510 = vmax.f32 %v490, 0.0
        %v511 = vmax.f32 %v492, 0.0
        %v512 = vmax.f32 %v494, 0.0
        %v513 = vmax.f32 %v496, 0.0
        %v514 = vpack.c.bf16 %v500, %v498
        %v515 = vpack.c.bf16 %v501, %v499
        %v516 = vpack.c.bf16 %v504, %v502
        %v517 = vpack.c.bf16 %v505, %v503
        %v518 = vpack.c.bf16 %v508, %v506
        %v519 = vpack.c.bf16 %v509, %v507
        %v520 = vpack.c.bf16 %v512, %v510
        %v521 = vpack.c.bf16 %v513, %v511
        %v522 = vld [vmem:[%s1 + $0x28] sm:$0xf]
        %v523 = vld [vmem:[%s1 + $0x2c] sm:$0xf]
        %v524 = vld [vmem:[%s1 + $0x30] sm:$0xf]
        %v525 = vld [vmem:[%s1 + $0x34] sm:$0xf]
        %v526 = vld [vmem:[%s1 + $0x38] sm:$0xf]
        %v527 = vld [vmem:[%s1 + $0x3c] sm:$0xf]
        %v528 = vld [vmem:[%s1 + $0x40] sm:$0xf]
        %v529 = vld [vmem:[%s1 + $0x44] sm:$0xf]
        %v530 = vld [vmem:[%s2 + $0x50] sm:$0xff]
        %v531 = vld [vmem:[%s2 + $0x58] sm:$0xff]
        %v532 = vld [vmem:[%s2 + $0x60] sm:$0xff]
        %v533 = vld [vmem:[%s2 + $0x68] sm:$0xff]
        %v534 = vld [vmem:[%s2 + $0x70] sm:$0xff]
        %v535 = vld [vmem:[%s2 + $0x78] sm:$0xff]
        %v536 = vld [vmem:[%s2 + $0x80] sm:$0xff]
        %v537 = vld [vmem:[%s2 + $0x88] sm:$0xff]
        %539 = vset.pattern.permute.xlu0 0
        %540 = vperm.xlu0 %539, %v530
        %v541 = vpop.permute.xlu0 %540
        %544 = vset.pattern.permute.xlu0 0
        %545 = vperm.xlu0 %544, %v531
        %v546 = vpop.permute.xlu0 %545
        %549 = vset.pattern.permute.xlu0 0
        %550 = vperm.xlu0 %549, %v532
        %v551 = vpop.permute.xlu0 %550
        %554 = vset.pattern.permute.xlu0 0
        %555 = vperm.xlu0 %554, %v533
        %v556 = vpop.permute.xlu0 %555
        %559 = vset.pattern.permute.xlu0 0
        %560 = vperm.xlu0 %559, %v534
        %v561 = vpop.permute.xlu0 %560
        %564 = vset.pattern.permute.xlu0 0
        %565 = vperm.xlu0 %564, %v535
        %v566 = vpop.permute.xlu0 %565
        %569 = vset.pattern.permute.xlu0 0
        %570 = vperm.xlu0 %569, %v536
        %v571 = vpop.permute.xlu0 %570
        %574 = vset.pattern.permute.xlu0 0
        %575 = vperm.xlu0 %574, %v537
        %v576 = vpop.permute.xlu0 %575
        %v586 = vunpack.c.l.b16 %v522
        %v587 = vunpack.c.l.b16 %v523
        %v588 = vunpack.c.l.b16 %v524
        %v589 = vunpack.c.l.b16 %v525
        %v590 = vunpack.c.l.b16 %v526
        %v591 = vunpack.c.l.b16 %v527
        %v592 = vunpack.c.l.b16 %v528
        %v593 = vunpack.c.l.b16 %v529
        %v594 = vpack.c.b16 %v587, %v586
        %v595 = vpack.c.b16 %v589, %v588
        %v596 = vpack.c.b16 %v591, %v590
        %v597 = vpack.c.b16 %v593, %v592
        %vm598 = vcmask 523264
        %v600 = vsel %vm598, %v594, 0
        %v603 = vsel %vm598, %v595, 0
        %v606 = vsel %vm598, %v596, 0
        %v609 = vsel %vm598, %v597, 0
        %611 = vmatprep.subr.bf16.mxu0 %v515
        %612 = vmatpush1.bf16.msra.mxu0 %v514
        %613 = vmatprep.subr.bf16.mxu0 %v517
        %614 = vmatpush1.bf16.msra.mxu0 %v516
        %615 = vmatprep.subr.bf16.mxu0 %v519
        %616 = vmatpush1.bf16.msra.mxu0 %v518
        %617 = vmatprep.subr.bf16.mxu0 %v521
        %618 = vmatpush1.bf16.msra.mxu0 %v520
        %619 = vmatprep.subr.bf16.mxu0 0
        %620 = vmatpush1.bf16.msra.mxu0 0
        %621 = vmatprep.subr.bf16.mxu0 0
        %622 = vmatpush1.bf16.msra.mxu0 0
        %623 = vmatprep.subr.bf16.mxu0 0
        %624 = vmatpush1.bf16.msra.mxu0 0
        %625 = vmatprep.subr.bf16.mxu0 0
        %626 = vmatpush1.bf16.msra.mxu0 0
        %627 = vmatprep.subr.bf16.mxu0 0
        %628 = vmatpush1.bf16.msra.mxu0 0
        %629 = vmatprep.subr.bf16.mxu0 0
        %630 = vmatpush1.bf16.msra.mxu0 0
        %631 = vmatprep.subr.bf16.mxu0 0
        %632 = vmatpush1.bf16.msra.mxu0 0
        %633 = vmatprep.subr.bf16.mxu0 0
        %634 = vmatpush1.bf16.msra.mxu0 0
        %635 = vmatprep.subr.bf16.mxu0 0
        %636 = vmatpush1.bf16.msra.mxu0 0
        %637 = vmatprep.subr.bf16.mxu0 0
        %638 = vmatpush1.bf16.msra.mxu0 0
        %639 = vmatprep.subr.bf16.mxu0 0
        %640 = vmatpush1.bf16.msra.mxu0 0
        %641 = vmatprep.subr.bf16.mxu0 0
        %642 = vmatpush1.bf16.msra.mxu0 0
        %643 = vmatprep.mubr.bf16.mxu0 0
        %644 = vmatmul.mubr.bf16.gmra.mrb[0].mxu0 %v600
        %v645 = vpop.f32.mrb[0].mxu0
        %v646 = vadd.f32 %v541, %v645
        %v647 = vpop.f32.mrb[0].mxu0
        %v648 = vadd.f32 %v541, %v647
        %v649 = vpop.f32.mrb[0].mxu0
        %v650 = vadd.f32 %v546, %v649
        %v651 = vpop.f32.mrb[0].mxu0
        %v652 = vadd.f32 %v546, %v651
        %653 = vmatprep.mubr.bf16.mxu0 0
        %654 = vmatmul.mubr.bf16.gmra.mrb[0].mxu0 %v603
        %v655 = vpop.f32.mrb[0].mxu0
        %v656 = vadd.f32 %v551, %v655
        %v657 = vpop.f32.mrb[0].mxu0
        %v658 = vadd.f32 %v551, %v657
        %v659 = vpop.f32.mrb[0].mxu0
        %v660 = vadd.f32 %v556, %v659
        %v661 = vpop.f32.mrb[0].mxu0
        %v662 = vadd.f32 %v556, %v661
        %663 = vmatprep.mubr.bf16.mxu0 0
        %664 = vmatmul.mubr.bf16.gmra.mrb[0].mxu0 %v606
        %v665 = vpop.f32.mrb[0].mxu0
        %v666 = vadd.f32 %v561, %v665
        %v667 = vpop.f32.mrb[0].mxu0
        %v668 = vadd.f32 %v561, %v667
        %v669 = vpop.f32.mrb[0].mxu0
        %v670 = vadd.f32 %v566, %v669
        %v671 = vpop.f32.mrb[0].mxu0
        %v672 = vadd.f32 %v566, %v671
        %673 = vmatprep.mubr.bf16.mxu0 0
        %674 = vmatmul.mubr.bf16.gmra.mrb[0].mxu0 %v609
        %v675 = vpop.f32.mrb[0].mxu0
        %v676 = vadd.f32 %v571, %v675
        %v677 = vpop.f32.mrb[0].mxu0
        %v678 = vadd.f32 %v571, %v677
        %v679 = vpop.f32.mrb[0].mxu0
        %v680 = vadd.f32 %v576, %v679
        %v681 = vpop.f32.mrb[0].mxu0
        %v682 = vadd.f32 %v576, %v681
        %683 = vdwg.mxu0
        %v684 = vmax.f32 %v646, 0.0
        %v685 = vmax.f32 %v648, 0.0
        %v686 = vmax.f32 %v650, 0.0
        %v687 = vmax.f32 %v652, 0.0
        %v688 = vmax.f32 %v656, 0.0
        %v689 = vmax.f32 %v658, 0.0
        %v690 = vmax.f32 %v660, 0.0
        %v691 = vmax.f32 %v662, 0.0
        %v692 = vmax.f32 %v666, 0.0
        %v693 = vmax.f32 %v668, 0.0
        %v694 = vmax.f32 %v670, 0.0
        %v695 = vmax.f32 %v672, 0.0
        %v696 = vmax.f32 %v676, 0.0
        %v697 = vmax.f32 %v678, 0.0
        %v698 = vmax.f32 %v680, 0.0
        %v699 = vmax.f32 %v682, 0.0
        %v700 = vpack.c.bf16 %v686, %v684
        %v701 = vpack.c.bf16 %v687, %v685
        %v702 = vpack.c.bf16 %v690, %v688
        %v703 = vpack.c.bf16 %v691, %v689
        %v704 = vpack.c.bf16 %v694, %v692
        %v705 = vpack.c.bf16 %v695, %v693
        %v706 = vpack.c.bf16 %v698, %v696
        %v707 = vpack.c.bf16 %v699, %v697
        %v708 = vld [vmem:[%s1 + $0x48] sm:$0xf]
        %v709 = vld [vmem:[%s1 + $0x4c] sm:$0xf]
        %v710 = vld [vmem:[%s2 + $0x90] sm:$0xff]
        %v711 = vld [vmem:[%s2 + $0x98] sm:$0xff]
        %713 = vset.pattern.permute.xlu0 0
        %714 = vperm.xlu0 %713, %v710
        %v715 = vpop.permute.xlu0 %714
        %718 = vset.pattern.permute.xlu0 0
        %719 = vperm.xlu0 %718, %v711
        %v720 = vpop.permute.xlu0 %719
        %v724 = vunpack.c.l.b16 %v708
        %v725 = vunpack.c.l.b16 %v709
        %v726 = vpack.c.b16 %v725, %v724
        %v728 = vsel %vm598, %v726, 0
        %730 = vmatprep.subr.bf16.mxu0 %v701
        %731 = vmatpush1.bf16.msra.mxu0 %v700
        %732 = vmatprep.subr.bf16.mxu0 %v703
        %733 = vmatpush1.bf16.msra.mxu0 %v702
        %734 = vmatprep.subr.bf16.mxu0 %v705
        %735 = vmatpush1.bf16.msra.mxu0 %v704
        %736 = vmatprep.subr.bf16.mxu0 %v707
        %737 = vmatpush1.bf16.msra.mxu0 %v706
        %738 = vmatprep.subr.bf16.mxu0 0
        %739 = vmatpush1.bf16.msra.mxu0 0
        %740 = vmatprep.subr.bf16.mxu0 0
        %741 = vmatpush1.bf16.msra.mxu0 0
        %742 = vmatprep.subr.bf16.mxu0 0
        %743 = vmatpush1.bf16.msra.mxu0 0
        %744 = vmatprep.subr.bf16.mxu0 0
        %745 = vmatpush1.bf16.msra.mxu0 0
        %746 = vmatprep.subr.bf16.mxu0 0
        %747 = vmatpush1.bf16.msra.mxu0 0
        %748 = vmatprep.subr.bf16.mxu0 0
        %749 = vmatpush1.bf16.msra.mxu0 0
        %750 = vmatprep.subr.bf16.mxu0 0
        %751 = vmatpush1.bf16.msra.mxu0 0
        %752 = vmatprep.subr.bf16.mxu0 0
        %753 = vmatpush1.bf16.msra.mxu0 0
        %754 = vmatprep.subr.bf16.mxu0 0
        %755 = vmatpush1.bf16.msra.mxu0 0
        %756 = vmatprep.subr.bf16.mxu0 0
        %757 = vmatpush1.bf16.msra.mxu0 0
        %758 = vmatprep.subr.bf16.mxu0 0
        %759 = vmatpush1.bf16.msra.mxu0 0
        %760 = vmatprep.subr.bf16.mxu0 0
        %761 = vmatpush1.bf16.msra.mxu0 0
        %762 = vmatprep.mubr.bf16.mxu0 0
        %763 = vmatmul.mubr.bf16.gmra.mrb[0].mxu0 %v728
        %v764 = vpop.f32.mrb[0].mxu0
        %v765 = vadd.f32 %v715, %v764
        %v766 = vpop.f32.mrb[0].mxu0
        %v767 = vadd.f32 %v715, %v766
        %v768 = vpop.f32.mrb[0].mxu0
        %v769 = vadd.f32 %v720, %v768
        %v770 = vpop.f32.mrb[0].mxu0
        %v771 = vadd.f32 %v720, %v770
        %772 = vdwg.mxu0
        %v773 = vadd.f32 %v765, %v330
        %v774 = vadd.f32 %v767, %v331
        %v775 = vadd.f32 %v769, %v332
        %v776 = vadd.f32 %v771, %v333
        %v777 = vmax.f32 %v773, 0.0
        %v778 = vmax.f32 %v774, 0.0
        %v779 = vmax.f32 %v775, 0.0
        %v780 = vmax.f32 %v776, 0.0
        %v781 = vpack.c.bf16 %v779, %v777
        %v782 = vpack.c.bf16 %v780, %v778
        %v783 = vld [vmem:[%s1 + $0x50] sm:$0xf]
        %v784 = vld [vmem:[%s1 + $0x54] sm:$0xf]
        %v785 = vld [vmem:[%s1 + $0x58] sm:$0xf]
        %v786 = vld [vmem:[%s1 + $0x5c] sm:$0xf]
        %v787 = vld [vmem:[%s1 + $0x60] sm:$0xf]
        %v788 = vld [vmem:[%s1 + $0x64] sm:$0xf]
        %v789 = vld [vmem:[%s1 + $0x68] sm:$0xf]
        %v790 = vld [vmem:[%s1 + $0x6c] sm:$0xf]
        %v791 = vld [vmem:[%s2 + $0xa0] sm:$0xff]
        %v792 = vld [vmem:[%s2 + $0xa8] sm:$0xff]
        %v793 = vld [vmem:[%s2 + $0xb0] sm:$0xff]
        %v794 = vld [vmem:[%s2 + $0xb8] sm:$0xff]
        %v795 = vld [vmem:[%s2 + $0xc0] sm:$0xff]
        %v796 = vld [vmem:[%s2 + $0xc8] sm:$0xff]
        %v797 = vld [vmem:[%s2 + $0xd0] sm:$0xff]
        %v798 = vld [vmem:[%s2 + $0xd8] sm:$0xff]
        %800 = vset.pattern.permute.xlu0 0
        %801 = vperm.xlu0 %800, %v791
        %v802 = vpop.permute.xlu0 %801
        %805 = vset.pattern.permute.xlu0 0
        %806 = vperm.xlu0 %805, %v792
        %v807 = vpop.permute.xlu0 %806
        %810 = vset.pattern.permute.xlu0 0
        %811 = vperm.xlu0 %810, %v793
        %v812 = vpop.permute.xlu0 %811
        %815 = vset.pattern.permute.xlu0 0
        %816 = vperm.xlu0 %815, %v794
        %v817 = vpop.permute.xlu0 %816
        %820 = vset.pattern.permute.xlu0 0
        %821 = vperm.xlu0 %820, %v795
        %v822 = vpop.permute.xlu0 %821
        %825 = vset.pattern.permute.xlu0 0
        %826 = vperm.xlu0 %825, %v796
        %v827 = vpop.permute.xlu0 %826
        %830 = vset.pattern.permute.xlu0 0
        %831 = vperm.xlu0 %830, %v797
        %v832 = vpop.permute.xlu0 %831
        %835 = vset.pattern.permute.xlu0 0
        %836 = vperm.xlu0 %835, %v798
        %v837 = vpop.permute.xlu0 %836
        %v847 = vunpack.c.l.b16 %v783
        %v848 = vunpack.c.l.b16 %v784
        %v849 = vunpack.c.l.b16 %v785
        %v850 = vunpack.c.l.b16 %v786
        %v851 = vunpack.c.l.b16 %v787
        %v852 = vunpack.c.l.b16 %v788
        %v853 = vunpack.c.l.b16 %v789
        %v854 = vunpack.c.l.b16 %v790
        %v855 = vpack.c.b16 %v848, %v847
        %v856 = vpack.c.b16 %v850, %v849
        %v857 = vpack.c.b16 %v852, %v851
        %v858 = vpack.c.b16 %v854, %v853
        %v860 = vsel %vm412, %v855, 0
        %v863 = vsel %vm412, %v856, 0
        %v866 = vsel %vm412, %v857, 0
        %v869 = vsel %vm412, %v858, 0
        %871 = vmatprep.subr.bf16.mxu0 %v782
        %872 = vmatpush1.bf16.msra.mxu0 %v781
        %873 = vmatprep.subr.bf16.mxu0 0
        %874 = vmatpush1.bf16.msra.mxu0 0
        %875 = vmatprep.subr.bf16.mxu0 0
        %876 = vmatpush1.bf16.msra.mxu0 0
        %877 = vmatprep.subr.bf16.mxu0 0
        %878 = vmatpush1.bf16.msra.mxu0 0
        %879 = vmatprep.subr.bf16.mxu0 0
        %880 = vmatpush1.bf16.msra.mxu0 0
        %881 = vmatprep.subr.bf16.mxu0 0
        %882 = vmatpush1.bf16.msra.mxu0 0
        %883 = vmatprep.subr.bf16.mxu0 0
        %884 = vmatpush1.bf16.msra.mxu0 0
        %885 = vmatprep.subr.bf16.mxu0 0
        %886 = vmatpush1.bf16.msra.mxu0 0
        %887 = vmatprep.subr.bf16.mxu0 0
        %888 = vmatpush1.bf16.msra.mxu0 0
        %889 = vmatprep.subr.bf16.mxu0 0
        %890 = vmatpush1.bf16.msra.mxu0 0
        %891 = vmatprep.subr.bf16.mxu0 0
        %892 = vmatpush1.bf16.msra.mxu0 0
        %893 = vmatprep.subr.bf16.mxu0 0
        %894 = vmatpush1.bf16.msra.mxu0 0
        %895 = vmatprep.subr.bf16.mxu0 0
        %896 = vmatpush1.bf16.msra.mxu0 0
        %897 = vmatprep.subr.bf16.mxu0 0
        %898 = vmatpush1.bf16.msra.mxu0 0
        %899 = vmatprep.subr.bf16.mxu0 0
        %900 = vmatpush1.bf16.msra.mxu0 0
        %901 = vmatprep.subr.bf16.mxu0 0
        %902 = vmatpush1.bf16.msra.mxu0 0
        %903 = vmatprep.mubr.bf16.mxu0 0
        %904 = vmatmul.mubr.bf16.gmra.mrb[0].mxu0 %v860
        %v905 = vpop.f32.mrb[0].mxu0
        %v906 = vadd.f32 %v802, %v905
        %v907 = vpop.f32.mrb[0].mxu0
        %v908 = vadd.f32 %v802, %v907
        %v909 = vpop.f32.mrb[0].mxu0
        %v910 = vadd.f32 %v807, %v909
        %v911 = vpop.f32.mrb[0].mxu0
        %v912 = vadd.f32 %v807, %v911
        %913 = vmatprep.mubr.bf16.mxu0 0
        %914 = vmatmul.mubr.bf16.gmra.mrb[0].mxu0 %v863
        %v915 = vpop.f32.mrb[0].mxu0
        %v916 = vadd.f32 %v812, %v915
        %v917 = vpop.f32.mrb[0].mxu0
        %v918 = vadd.f32 %v812, %v917
        %v919 = vpop.f32.mrb[0].mxu0
        %v920 = vadd.f32 %v817, %v919
        %v921 = vpop.f32.mrb[0].mxu0
        %v922 = vadd.f32 %v817, %v921
        %923 = vmatprep.mubr.bf16.mxu0 0
        %924 = vmatmul.mubr.bf16.gmra.mrb[0].mxu0 %v866
        %v925 = vpop.f32.mrb[0].mxu0
        %v926 = vadd.f32 %v822, %v925
        %v927 = vpop.f32.mrb[0].mxu0
        %v928 = vadd.f32 %v822, %v927
        %v929 = vpop.f32.mrb[0].mxu0
        %v930 = vadd.f32 %v827, %v929
        %v931 = vpop.f32.mrb[0].mxu0
        %v932 = vadd.f32 %v827, %v931
        %933 = vmatprep.mubr.bf16.mxu0 0
        %934 = vmatmul.mubr.bf16.gmra.mrb[0].mxu0 %v869
        %v935 = vpop.f32.mrb[0].mxu0
        %v936 = vadd.f32 %v832, %v935
        %v937 = vpop.f32.mrb[0].mxu0
        %v938 = vadd.f32 %v832, %v937
        %v939 = vpop.f32.mrb[0].mxu0
        %v940 = vadd.f32 %v837, %v939
        %v941 = vpop.f32.mrb[0].mxu0
        %v942 = vadd.f32 %v837, %v941
        %943 = vdwg.mxu0
        %v944 = vmax.f32 %v906, 0.0
        %v945 = vmax.f32 %v908, 0.0
        %v946 = vmax.f32 %v910, 0.0
        %v947 = vmax.f32 %v912, 0.0
        %v948 = vmax.f32 %v916, 0.0
        %v949 = vmax.f32 %v918, 0.0
        %v950 = vmax.f32 %v920, 0.0
        %v951 = vmax.f32 %v922, 0.0
        %v952 = vmax.f32 %v926, 0.0
        %v953 = vmax.f32 %v928, 0.0
        %v954 = vmax.f32 %v930, 0.0
        %v955 = vmax.f32 %v932, 0.0
        %v956 = vmax.f32 %v936, 0.0
        %v957 = vmax.f32 %v938, 0.0
        %v958 = vmax.f32 %v940, 0.0
        %v959 = vmax.f32 %v942, 0.0
        %v960 = vpack.c.bf16 %v946, %v944
        %v961 = vpack.c.bf16 %v947, %v945
        %v962 = vpack.c.bf16 %v950, %v948
        %v963 = vpack.c.bf16 %v951, %v949
        %v964 = vpack.c.bf16 %v954, %v952
        %v965 = vpack.c.bf16 %v955, %v953
        %v966 = vpack.c.bf16 %v958, %v956
        %v967 = vpack.c.bf16 %v959, %v957
        %v968 = vld [vmem:[%s1 + $0x70] sm:$0xf]
        %v969 = vld [vmem:[%s1 + $0x74] sm:$0xf]
        %v970 = vld [vmem:[%s1 + $0x78] sm:$0xf]
        %v971 = vld [vmem:[%s1 + $0x7c] sm:$0xf]
        %v972 = vld [vmem:[%s1 + $0x80] sm:$0xf]
        %v973 = vld [vmem:[%s1 + $0x84] sm:$0xf]
        %v974 = vld [vmem:[%s1 + $0x88] sm:$0xf]
        %v975 = vld [vmem:[%s1 + $0x8c] sm:$0xf]
        %v976 = vld [vmem:[%s2 + $0xe0] sm:$0xff]
        %v977 = vld [vmem:[%s2 + $0xe8] sm:$0xff]
        %v978 = vld [vmem:[%s2 + $0xf0] sm:$0xff]
        %v979 = vld [vmem:[%s2 + $0xf8] sm:$0xff]
        %v980 = vld [vmem:[%s2 + $0x100] sm:$0xff]
        %v981 = vld [vmem:[%s2 + $0x108] sm:$0xff]
        %v982 = vld [vmem:[%s2 + $0x110] sm:$0xff]
        %v983 = vld [vmem:[%s2 + $0x118] sm:$0xff]
        %985 = vset.pattern.permute.xlu0 0
        %986 = vperm.xlu0 %985, %v976
        %v987 = vpop.permute.xlu0 %986
        %990 = vset.pattern.permute.xlu0 0
        %991 = vperm.xlu0 %990, %v977
        %v992 = vpop.permute.xlu0 %991
        %995 = vset.pattern.permute.xlu0 0
        %996 = vperm.xlu0 %995, %v978
        %v997 = vpop.permute.xlu0 %996
        %1000 = vset.pattern.permute.xlu0 0
        %1001 = vperm.xlu0 %1000, %v979
        %v1002 = vpop.permute.xlu0 %1001
        %1005 = vset.pattern.permute.xlu0 0
        %1006 = vperm.xlu0 %1005, %v980
        %v1007 = vpop.permute.xlu0 %1006
        %1010 = vset.pattern.permute.xlu0 0
        %1011 = vperm.xlu0 %1010, %v981
        %v1012 = vpop.permute.xlu0 %1011
        %1015 = vset.pattern.permute.xlu0 0
        %1016 = vperm.xlu0 %1015, %v982
        %v1017 = vpop.permute.xlu0 %1016
        %1020 = vset.pattern.permute.xlu0 0
        %1021 = vperm.xlu0 %1020, %v983
        %v1022 = vpop.permute.xlu0 %1021
        %v1032 = vunpack.c.l.b16 %v968
        %v1033 = vunpack.c.l.b16 %v969
        %v1034 = vunpack.c.l.b16 %v970
        %v1035 = vunpack.c.l.b16 %v971
        %v1036 = vunpack.c.l.b16 %v972
        %v1037 = vunpack.c.l.b16 %v973
        %v1038 = vunpack.c.l.b16 %v974
        %v1039 = vunpack.c.l.b16 %v975
        %v1040 = vpack.c.b16 %v1033, %v1032
        %v1041 = vpack.c.b16 %v1035, %v1034
        %v1042 = vpack.c.b16 %v1037, %v1036
        %v1043 = vpack.c.b16 %v1039, %v1038
        %v1045 = vsel %vm598, %v1040, 0
        %v1048 = vsel %vm598, %v1041, 0
        %v1051 = vsel %vm598, %v1042, 0
        %v1054 = vsel %vm598, %v1043, 0
        %1056 = vmatprep.subr.bf16.mxu0 %v961
        %1057 = vmatpush1.bf16.msra.mxu0 %v960
        %1058 = vmatprep.subr.bf16.mxu0 %v963
        %1059 = vmatpush1.bf16.msra.mxu0 %v962
        %1060 = vmatprep.subr.bf16.mxu0 %v965
        %1061 = vmatpush1.bf16.msra.mxu0 %v964
        %1062 = vmatprep.subr.bf16.mxu0 %v967
        %1063 = vmatpush1.bf16.msra.mxu0 %v966
        %1064 = vmatprep.subr.bf16.mxu0 0
        %1065 = vmatpush1.bf16.msra.mxu0 0
        %1066 = vmatprep.subr.bf16.mxu0 0
        %1067 = vmatpush1.bf16.msra.mxu0 0
        %1068 = vmatprep.subr.bf16.mxu0 0
        %1069 = vmatpush1.bf16.msra.mxu0 0
        %1070 = vmatprep.subr.bf16.mxu0 0
        %1071 = vmatpush1.bf16.msra.mxu0 0
        %1072 = vmatprep.subr.bf16.mxu0 0
        %1073 = vmatpush1.bf16.msra.mxu0 0
        %1074 = vmatprep.subr.bf16.mxu0 0
        %1075 = vmatpush1.bf16.msra.mxu0 0
        %1076 = vmatprep.subr.bf16.mxu0 0
        %1077 = vmatpush1.bf16.msra.mxu0 0
        %1078 = vmatprep.subr.bf16.mxu0 0
        %1079 = vmatpush1.bf16.msra.mxu0 0
        %1080 = vmatprep.subr.bf16.mxu0 0
        %1081 = vmatpush1.bf16.msra.mxu0 0
        %1082 = vmatprep.subr.bf16.mxu0 0
        %1083 = vmatpush1.bf16.msra.mxu0 0
        %1084 = vmatprep.subr.bf16.mxu0 0
        %1085 = vmatpush1.bf16.msra.mxu0 0
        %1086 = vmatprep.subr.bf16.mxu0 0
        %1087 = vmatpush1.bf16.msra.mxu0 0
        %1088 = vmatprep.mubr.bf16.mxu0 0
        %1089 = vmatmul.mubr.bf16.gmra.mrb[0].mxu0 %v1045
        %v1090 = vpop.f32.mrb[0].mxu0
        %v1091 = vadd.f32 %v987, %v1090
        %v1092 = vpop.f32.mrb[0].mxu0
        %v1093 = vadd.f32 %v987, %v1092
        %v1094 = vpop.f32.mrb[0].mxu0
        %v1095 = vadd.f32 %v992, %v1094
        %v1096 = vpop.f32.mrb[0].mxu0
        %v1097 = vadd.f32 %v992, %v1096
        %1098 = vmatprep.mubr.bf16.mxu0 0
        %1099 = vmatmul.mubr.bf16.gmra.mrb[0].mxu0 %v1048
        %v1100 = vpop.f32.mrb[0].mxu0
        %v1101 = vadd.f32 %v997, %v1100
        %v1102 = vpop.f32.mrb[0].mxu0
        %v1103 = vadd.f32 %v997, %v1102
        %v1104 = vpop.f32.mrb[0].mxu0
        %v1105 = vadd.f32 %v1002, %v1104
        %v1106 = vpop.f32.mrb[0].mxu0
        %v1107 = vadd.f32 %v1002, %v1106
        %1108 = vmatprep.mubr.bf16.mxu0 0
        %1109 = vmatmul.mubr.bf16.gmra.mrb[0].mxu0 %v1051
        %v1110 = vpop.f32.mrb[0].mxu0
        %v1111 = vadd.f32 %v1007, %v1110
        %v1112 = vpop.f32.mrb[0].mxu0
        %v1113 = vadd.f32 %v1007, %v1112
        %v1114 = vpop.f32.mrb[0].mxu0
        %v1115 = vadd.f32 %v1012, %v1114
        %v1116 = vpop.f32.mrb[0].mxu0
        %v1117 = vadd.f32 %v1012, %v1116
        %1118 = vmatprep.mubr.bf16.mxu0 0
        %1119 = vmatmul.mubr.bf16.gmra.mrb[0].mxu0 %v1054
        %v1120 = vpop.f32.mrb[0].mxu0
        %v1121 = vadd.f32 %v1017, %v1120
        %v1122 = vpop.f32.mrb[0].mxu0
        %v1123 = vadd.f32 %v1017, %v1122
        %v1124 = vpop.f32.mrb[0].mxu0
        %v1125 = vadd.f32 %v1022, %v1124
        %v1126 = vpop.f32.mrb[0].mxu0
        %v1127 = vadd.f32 %v1022, %v1126
        %1128 = vdwg.mxu0
        %v1129 = vmax.f32 %v1091, 0.0
        %v1130 = vmax.f32 %v1093, 0.0
        %v1131 = vmax.f32 %v1095, 0.0
        %v1132 = vmax.f32 %v1097, 0.0
        %v1133 = vmax.f32 %v1101, 0.0
        %v1134 = vmax.f32 %v1103, 0.0
        %v1135 = vmax.f32 %v1105, 0.0
        %v1136 = vmax.f32 %v1107, 0.0
        %v1137 = vmax.f32 %v1111, 0.0
        %v1138 = vmax.f32 %v1113, 0.0
        %v1139 = vmax.f32 %v1115, 0.0
        %v1140 = vmax.f32 %v1117, 0.0
        %v1141 = vmax.f32 %v1121, 0.0
        %v1142 = vmax.f32 %v1123, 0.0
        %v1143 = vmax.f32 %v1125, 0.0
        %v1144 = vmax.f32 %v1127, 0.0
        %v1145 = vpack.c.bf16 %v1131, %v1129
        %v1146 = vpack.c.bf16 %v1132, %v1130
        %v1147 = vpack.c.bf16 %v1135, %v1133
        %v1148 = vpack.c.bf16 %v1136, %v1134
        %v1149 = vpack.c.bf16 %v1139, %v1137
        %v1150 = vpack.c.bf16 %v1140, %v1138
        %v1151 = vpack.c.bf16 %v1143, %v1141
        %v1152 = vpack.c.bf16 %v1144, %v1142
        %v1153 = vld [vmem:[%s1 + $0x90] sm:$0xf]
        %v1154 = vld [vmem:[%s1 + $0x94] sm:$0xf]
        %v1155 = vld [vmem:[%s2 + $0x120] sm:$0xff]
        %v1156 = vld [vmem:[%s2 + $0x128] sm:$0xff]
        %1158 = vset.pattern.permute.xlu0 0
        %1159 = vperm.xlu0 %1158, %v1155
        %v1160 = vpop.permute.xlu0 %1159
        %1163 = vset.pattern.permute.xlu0 0
        %1164 = vperm.xlu0 %1163, %v1156
        %v1165 = vpop.permute.xlu0 %1164
        %v1169 = vunpack.c.l.b16 %v1153
        %v1170 = vunpack.c.l.b16 %v1154
        %v1171 = vpack.c.b16 %v1170, %v1169
        %v1173 = vsel %vm598, %v1171, 0
        %1175 = vmatprep.subr.bf16.mxu0 %v1146
        %1176 = vmatpush1.bf16.msra.mxu0 %v1145
        %1177 = vmatprep.subr.bf16.mxu0 %v1148
        %1178 = vmatpush1.bf16.msra.mxu0 %v1147
        %1179 = vmatprep.subr.bf16.mxu0 %v1150
        %1180 = vmatpush1.bf16.msra.mxu0 %v1149
        %1181 = vmatprep.subr.bf16.mxu0 %v1152
        %1182 = vmatpush1.bf16.msra.mxu0 %v1151
        %1183 = vmatprep.subr.bf16.mxu0 0
        %1184 = vmatpush1.bf16.msra.mxu0 0
        %1185 = vmatprep.subr.bf16.mxu0 0
        %1186 = vmatpush1.bf16.msra.mxu0 0
        %1187 = vmatprep.subr.bf16.mxu0 0
        %1188 = vmatpush1.bf16.msra.mxu0 0
        %1189 = vmatprep.subr.bf16.mxu0 0
        %1190 = vmatpush1.bf16.msra.mxu0 0
        %1191 = vmatprep.subr.bf16.mxu0 0
        %1192 = vmatpush1.bf16.msra.mxu0 0
        %1193 = vmatprep.subr.bf16.mxu0 0
        %1194 = vmatpush1.bf16.msra.mxu0 0
        %1195 = vmatprep.subr.bf16.mxu0 0
        %1196 = vmatpush1.bf16.msra.mxu0 0
        %1197 = vmatprep.subr.bf16.mxu0 0
        %1198 = vmatpush1.bf16.msra.mxu0 0
        %1199 = vmatprep.subr.bf16.mxu0 0
        %1200 = vmatpush1.bf16.msra.mxu0 0
        %1201 = vmatprep.subr.bf16.mxu0 0
        %1202 = vmatpush1.bf16.msra.mxu0 0
        %1203 = vmatprep.subr.bf16.mxu0 0
        %1204 = vmatpush1.bf16.msra.mxu0 0
        %1205 = vmatprep.subr.bf16.mxu0 0
        %1206 = vmatpush1.bf16.msra.mxu0 0
        %1207 = vmatprep.mubr.bf16.mxu0 0
        %1208 = vmatmul.mubr.bf16.gmra.mrb[0].mxu0 %v1173
        %v1209 = vpop.f32.mrb[0].mxu0
        %v1210 = vadd.f32 %v1160, %v1209
        %v1211 = vpop.f32.mrb[0].mxu0
        %v1212 = vadd.f32 %v1160, %v1211
        %v1213 = vpop.f32.mrb[0].mxu0
        %v1214 = vadd.f32 %v1165, %v1213
        %v1215 = vpop.f32.mrb[0].mxu0
        %v1216 = vadd.f32 %v1165, %v1215
        %1217 = vdwg.mxu0
        %v1218 = vadd.f32 %v1210, %v777
        %v1219 = vadd.f32 %v1212, %v778
        %v1220 = vadd.f32 %v1214, %v779
        %v1221 = vadd.f32 %v1216, %v780
        %v1222 = vmax.f32 %v1218, 0.0
        %v1223 = vmax.f32 %v1219, 0.0
        %v1224 = vmax.f32 %v1220, 0.0
        %v1225 = vmax.f32 %v1221, 0.0
        %v1226 = vpack.c.bf16 %v1224, %v1222
        %v1227 = vpack.c.bf16 %v1225, %v1223
        %v1228 = vld [vmem:[%s1 + $0x98] sm:$0xf]
        %v1229 = vld [vmem:[%s1 + $0x9c] sm:$0xf]
        %v1230 = vld [vmem:[%s1 + $0xa0] sm:$0xf]
        %v1231 = vld [vmem:[%s1 + $0xa4] sm:$0xf]
        %v1232 = vld [vmem:[%s1 + $0xa8] sm:$0xf]
        %v1233 = vld [vmem:[%s1 + $0xac] sm:$0xf]
        %v1234 = vld [vmem:[%s1 + $0xb0] sm:$0xf]
        %v1235 = vld [vmem:[%s1 + $0xb4] sm:$0xf]
        %v1236 = vld [vmem:[%s2 + $0x130] sm:$0xff]
        %v1237 = vld [vmem:[%s2 + $0x138] sm:$0xff]
        %v1238 = vld [vmem:[%s2 + $0x140] sm:$0xff]
        %v1239 = vld [vmem:[%s2 + $0x148] sm:$0xff]
        %v1240 = vld [vmem:[%s2 + $0x150] sm:$0xff]
        %v1241 = vld [vmem:[%s2 + $0x158] sm:$0xff]
        %v1242 = vld [vmem:[%s2 + $0x160] sm:$0xff]
        %v1243 = vld [vmem:[%s2 + $0x168] sm:$0xff]
        %1245 = vset.pattern.permute.xlu0 0
        %1246 = vperm.xlu0 %1245, %v1236
        %v1247 = vpop.permute.xlu0 %1246
        %1250 = vset.pattern.permute.xlu0 0
        %1251 = vperm.xlu0 %1250, %v1237
        %v1252 = vpop.permute.xlu0 %1251
        %1255 = vset.pattern.permute.xlu0 0
        %1256 = vperm.xlu0 %1255, %v1238
        %v1257 = vpop.permute.xlu0 %1256
        %1260 = vset.pattern.permute.xlu0 0
        %1261 = vperm.xlu0 %1260, %v1239
        %v1262 = vpop.permute.xlu0 %1261
        %1265 = vset.pattern.permute.xlu0 0
        %1266 = vperm.xlu0 %1265, %v1240
        %v1267 = vpop.permute.xlu0 %1266
        %1270 = vset.pattern.permute.xlu0 0
        %1271 = vperm.xlu0 %1270, %v1241
        %v1272 = vpop.permute.xlu0 %1271
        %1275 = vset.pattern.permute.xlu0 0
        %1276 = vperm.xlu0 %1275, %v1242
        %v1277 = vpop.permute.xlu0 %1276
        %1280 = vset.pattern.permute.xlu0 0
        %1281 = vperm.xlu0 %1280, %v1243
        %v1282 = vpop.permute.xlu0 %1281
        %v1292 = vunpack.c.l.b16 %v1228
        %v1293 = vunpack.c.l.b16 %v1229
        %v1294 = vunpack.c.l.b16 %v1230
        %v1295 = vunpack.c.l.b16 %v1231
        %v1296 = vunpack.c.l.b16 %v1232
        %v1297 = vunpack.c.l.b16 %v1233
        %v1298 = vunpack.c.l.b16 %v1234
        %v1299 = vunpack.c.l.b16 %v1235
        %v1300 = vpack.c.b16 %v1293, %v1292
        %v1301 = vpack.c.b16 %v1295, %v1294
        %v1302 = vpack.c.b16 %v1297, %v1296
        %v1303 = vpack.c.b16 %v1299, %v1298
        %v1305 = vsel %vm412, %v1300, 0
        %v1308 = vsel %vm412, %v1301, 0
        %v1311 = vsel %vm412, %v1302, 0
        %v1314 = vsel %vm412, %v1303, 0
        %1316 = vmatprep.subr.bf16.mxu0 %v1227
        %1317 = vmatpush1.bf16.msra.mxu0 %v1226
        %1318 = vmatprep.subr.bf16.mxu0 0
        %1319 = vmatpush1.bf16.msra.mxu0 0
        %1320 = vmatprep.subr.bf16.mxu0 0
        %1321 = vmatpush1.bf16.msra.mxu0 0
        %1322 = vmatprep.subr.bf16.mxu0 0
        %1323 = vmatpush1.bf16.msra.mxu0 0
        %1324 = vmatprep.subr.bf16.mxu0 0
        %1325 = vmatpush1.bf16.msra.mxu0 0
        %1326 = vmatprep.subr.bf16.mxu0 0
        %1327 = vmatpush1.bf16.msra.mxu0 0
        %1328 = vmatprep.subr.bf16.mxu0 0
        %1329 = vmatpush1.bf16.msra.mxu0 0
        %1330 = vmatprep.subr.bf16.mxu0 0
        %1331 = vmatpush1.bf16.msra.mxu0 0
        %1332 = vmatprep.subr.bf16.mxu0 0
        %1333 = vmatpush1.bf16.msra.mxu0 0
        %1334 = vmatprep.subr.bf16.mxu0 0
        %1335 = vmatpush1.bf16.msra.mxu0 0
        %1336 = vmatprep.subr.bf16.mxu0 0
        %1337 = vmatpush1.bf16.msra.mxu0 0
        %1338 = vmatprep.subr.bf16.mxu0 0
        %1339 = vmatpush1.bf16.msra.mxu0 0
        %1340 = vmatprep.subr.bf16.mxu0 0
        %1341 = vmatpush1.bf16.msra.mxu0 0
        %1342 = vmatprep.subr.bf16.mxu0 0
        %1343 = vmatpush1.bf16.msra.mxu0 0
        %1344 = vmatprep.subr.bf16.mxu0 0
        %1345 = vmatpush1.bf16.msra.mxu0 0
        %1346 = vmatprep.subr.bf16.mxu0 0
        %1347 = vmatpush1.bf16.msra.mxu0 0
        %1348 = vmatprep.mubr.bf16.mxu0 0
        %1349 = vmatmul.mubr.bf16.gmra.mrb[0].mxu0 %v1305
        %v1350 = vpop.f32.mrb[0].mxu0
        %v1351 = vadd.f32 %v1247, %v1350
        %v1352 = vpop.f32.mrb[0].mxu0
        %v1353 = vadd.f32 %v1247, %v1352
        %v1354 = vpop.f32.mrb[0].mxu0
        %v1355 = vadd.f32 %v1252, %v1354
        %v1356 = vpop.f32.mrb[0].mxu0
        %v1357 = vadd.f32 %v1252, %v1356
        %1358 = vmatprep.mubr.bf16.mxu0 0
        %1359 = vmatmul.mubr.bf16.gmra.mrb[0].mxu0 %v1308
        %v1360 = vpop.f32.mrb[0].mxu0
        %v1361 = vadd.f32 %v1257, %v1360
        %v1362 = vpop.f32.mrb[0].mxu0
        %v1363 = vadd.f32 %v1257, %v1362
        %v1364 = vpop.f32.mrb[0].mxu0
        %v1365 = vadd.f32 %v1262, %v1364
        %v1366 = vpop.f32.mrb[0].mxu0
        %v1367 = vadd.f32 %v1262, %v1366
        %1368 = vmatprep.mubr.bf16.mxu0 0
        %1369 = vmatmul.mubr.bf16.gmra.mrb[0].mxu0 %v1311
        %v1370 = vpop.f32.mrb[0].mxu0
        %v1371 = vadd.f32 %v1267, %v1370
        %v1372 = vpop.f32.mrb[0].mxu0
        %v1373 = vadd.f32 %v1267, %v1372
        %v1374 = vpop.f32.mrb[0].mxu0
        %v1375 = vadd.f32 %v1272, %v1374
        %v1376 = vpop.f32.mrb[0].mxu0
        %v1377 = vadd.f32 %v1272, %v1376
        %1378 = vmatprep.mubr.bf16.mxu0 0
        %1379 = vmatmul.mubr.bf16.gmra.mrb[0].mxu0 %v1314
        %v1380 = vpop.f32.mrb[0].mxu0
        %v1381 = vadd.f32 %v1277, %v1380
        %v1382 = vpop.f32.mrb[0].mxu0
        %v1383 = vadd.f32 %v1277, %v1382
        %v1384 = vpop.f32.mrb[0].mxu0
        %v1385 = vadd.f32 %v1282, %v1384
        %v1386 = vpop.f32.mrb[0].mxu0
        %v1387 = vadd.f32 %v1282, %v1386
        %1388 = vdwg.mxu0
        %v1389 = vmax.f32 %v1351, 0.0
        %v1390 = vmax.f32 %v1353, 0.0
        %v1391 = vmax.f32 %v1355, 0.0
        %v1392 = vmax.f32 %v1357, 0.0
        %v1393 = vmax.f32 %v1361, 0.0
        %v1394 = vmax.f32 %v1363, 0.0
        %v1395 = vmax.f32 %v1365, 0.0
        %v1396 = vmax.f32 %v1367, 0.0
        %v1397 = vmax.f32 %v1371, 0.0
        %v1398 = vmax.f32 %v1373, 0.0
        %v1399 = vmax.f32 %v1375, 0.0
        %v1400 = vmax.f32 %v1377, 0.0
        %v1401 = vmax.f32 %v1381, 0.0
        %v1402 = vmax.f32 %v1383, 0.0
        %v1403 = vmax.f32 %v1385, 0.0
        %v1404 = vmax.f32 %v1387, 0.0
        %v1405 = vpack.c.bf16 %v1391, %v1389
        %v1406 = vpack.c.bf16 %v1392, %v1390
        %v1407 = vpack.c.bf16 %v1395, %v1393
        %v1408 = vpack.c.bf16 %v1396, %v1394
        %v1409 = vpack.c.bf16 %v1399, %v1397
        %v1410 = vpack.c.bf16 %v1400, %v1398
        %v1411 = vpack.c.bf16 %v1403, %v1401
        %v1412 = vpack.c.bf16 %v1404, %v1402
        %v1413 = vld [vmem:[%s1 + $0xb8] sm:$0xf]
        %v1414 = vld [vmem:[%s1 + $0xbc] sm:$0xf]
        %v1415 = vld [vmem:[%s1 + $0xc0] sm:$0xf]
        %v1416 = vld [vmem:[%s1 + $0xc4] sm:$0xf]
        %v1417 = vld [vmem:[%s1 + $0xc8] sm:$0xf]
        %v1418 = vld [vmem:[%s1 + $0xcc] sm:$0xf]
        %v1419 = vld [vmem:[%s1 + $0xd0] sm:$0xf]
        %v1420 = vld [vmem:[%s1 + $0xd4] sm:$0xf]
        %v1421 = vld [vmem:[%s2 + $0x170] sm:$0xff]
        %v1422 = vld [vmem:[%s2 + $0x178] sm:$0xff]
        %v1423 = vld [vmem:[%s2 + $0x180] sm:$0xff]
        %v1424 = vld [vmem:[%s2 + $0x188] sm:$0xff]
        %v1425 = vld [vmem:[%s2 + $0x190] sm:$0xff]
        %v1426 = vld [vmem:[%s2 + $0x198] sm:$0xff]
        %v1427 = vld [vmem:[%s2 + $0x1a0] sm:$0xff]
        %v1428 = vld [vmem:[%s2 + $0x1a8] sm:$0xff]
        %1430 = vset.pattern.permute.xlu0 0
        %1431 = vperm.xlu0 %1430, %v1421
        %v1432 = vpop.permute.xlu0 %1431
        %1435 = vset.pattern.permute.xlu0 0
        %1436 = vperm.xlu0 %1435, %v1422
        %v1437 = vpop.permute.xlu0 %1436
        %1440 = vset.pattern.permute.xlu0 0
        %1441 = vperm.xlu0 %1440, %v1423
        %v1442 = vpop.permute.xlu0 %1441
        %1445 = vset.pattern.permute.xlu0 0
        %1446 = vperm.xlu0 %1445, %v1424
        %v1447 = vpop.permute.xlu0 %1446
        %1450 = vset.pattern.permute.xlu0 0
        %1451 = vperm.xlu0 %1450, %v1425
        %v1452 = vpop.permute.xlu0 %1451
        %1455 = vset.pattern.permute.xlu0 0
        %1456 = vperm.xlu0 %1455, %v1426
        %v1457 = vpop.permute.xlu0 %1456
        %1460 = vset.pattern.permute.xlu0 0
        %1461 = vperm.xlu0 %1460, %v1427
        %v1462 = vpop.permute.xlu0 %1461
        %1465 = vset.pattern.permute.xlu0 0
        %1466 = vperm.xlu0 %1465, %v1428
        %v1467 = vpop.permute.xlu0 %1466
        %v1477 = vunpack.c.l.b16 %v1413
        %v1478 = vunpack.c.l.b16 %v1414
        %v1479 = vunpack.c.l.b16 %v1415
        %v1480 = vunpack.c.l.b16 %v1416
        %v1481 = vunpack.c.l.b16 %v1417
        %v1482 = vunpack.c.l.b16 %v1418
        %v1483 = vunpack.c.l.b16 %v1419
        %v1484 = vunpack.c.l.b16 %v1420
        %v1485 = vpack.c.b16 %v1478, %v1477
        %v1486 = vpack.c.b16 %v1480, %v1479
        %v1487 = vpack.c.b16 %v1482, %v1481
        %v1488 = vpack.c.b16 %v1484, %v1483
        %v1490 = vsel %vm598, %v1485, 0
        %v1493 = vsel %vm598, %v1486, 0
        %v1496 = vsel %vm598, %v1487, 0
        %v1499 = vsel %vm598, %v1488, 0
        %1501 = vmatprep.subr.bf16.mxu0 %v1406
        %1502 = vmatpush1.bf16.msra.mxu0 %v1405
        %1503 = vmatprep.subr.bf16.mxu0 %v1408
        %1504 = vmatpush1.bf16.msra.mxu0 %v1407
        %1505 = vmatprep.subr.bf16.mxu0 %v1410
        %1506 = vmatpush1.bf16.msra.mxu0 %v1409
        %1507 = vmatprep.subr.bf16.mxu0 %v1412
        %1508 = vmatpush1.bf16.msra.mxu0 %v1411
        %1509 = vmatprep.subr.bf16.mxu0 0
        %1510 = vmatpush1.bf16.msra.mxu0 0
        %1511 = vmatprep.subr.bf16.mxu0 0
        %1512 = vmatpush1.bf16.msra.mxu0 0
        %1513 = vmatprep.subr.bf16.mxu0 0
        %1514 = vmatpush1.bf16.msra.mxu0 0
        %1515 = vmatprep.subr.bf16.mxu0 0
        %1516 = vmatpush1.bf16.msra.mxu0 0
        %1517 = vmatprep.subr.bf16.mxu0 0
        %1518 = vmatpush1.bf16.msra.mxu0 0
        %1519 = vmatprep.subr.bf16.mxu0 0
        %1520 = vmatpush1.bf16.msra.mxu0 0
        %1521 = vmatprep.subr.bf16.mxu0 0
        %1522 = vmatpush1.bf16.msra.mxu0 0
        %1523 = vmatprep.subr.bf16.mxu0 0
        %1524 = vmatpush1.bf16.msra.mxu0 0
        %1525 = vmatprep.subr.bf16.mxu0 0
        %1526 = vmatpush1.bf16.msra.mxu0 0
        %1527 = vmatprep.subr.bf16.mxu0 0
        %1528 = vmatpush1.bf16.msra.mxu0 0
        %1529 = vmatprep.subr.bf16.mxu0 0
        %1530 = vmatpush1.bf16.msra.mxu0 0
        %1531 = vmatprep.subr.bf16.mxu0 0
        %1532 = vmatpush1.bf16.msra.mxu0 0
        %1533 = vmatprep.mubr.bf16.mxu0 0
        %1534 = vmatmul.mubr.bf16.gmra.mrb[0].mxu0 %v1490
        %v1535 = vpop.f32.mrb[0].mxu0
        %v1536 = vadd.f32 %v1432, %v1535
        %v1537 = vpop.f32.mrb[0].mxu0
        %v1538 = vadd.f32 %v1432, %v1537
        %v1539 = vpop.f32.mrb[0].mxu0
        %v1540 = vadd.f32 %v1437, %v1539
        %v1541 = vpop.f32.mrb[0].mxu0
        %v1542 = vadd.f32 %v1437, %v1541
        %1543 = vmatprep.mubr.bf16.mxu0 0
        %1544 = vmatmul.mubr.bf16.gmra.mrb[0].mxu0 %v1493
        %v1545 = vpop.f32.mrb[0].mxu0
        %v1546 = vadd.f32 %v1442, %v1545
        %v1547 = vpop.f32.mrb[0].mxu0
        %v1548 = vadd.f32 %v1442, %v1547
        %v1549 = vpop.f32.mrb[0].mxu0
        %v1550 = vadd.f32 %v1447, %v1549
        %v1551 = vpop.f32.mrb[0].mxu0
        %v1552 = vadd.f32 %v1447, %v1551
        %1553 = vmatprep.mubr.bf16.mxu0 0
        %1554 = vmatmul.mubr.bf16.gmra.mrb[0].mxu0 %v1496
        %v1555 = vpop.f32.mrb[0].mxu0
        %v1556 = vadd.f32 %v1452, %v1555
        %v1557 = vpop.f32.mrb[0].mxu0
        %v1558 = vadd.f32 %v1452, %v1557
        %v1559 = vpop.f32.mrb[0].mxu0
        %v1560 = vadd.f32 %v1457, %v1559
        %v1561 = vpop.f32.mrb[0].mxu0
        %v1562 = vadd.f32 %v1457, %v1561
        %1563 = vmatprep.mubr.bf16.mxu0 0
        %1564 = vmatmul.mubr.bf16.gmra.mrb[0].mxu0 %v1499
        %v1565 = vpop.f32.mrb[0].mxu0
        %v1566 = vadd.f32 %v1462, %v1565
        %v1567 = vpop.f32.mrb[0].mxu0
        %v1568 = vadd.f32 %v1462, %v1567
        %v1569 = vpop.f32.mrb[0].mxu0
        %v1570 = vadd.f32 %v1467, %v1569
        %v1571 = vpop.f32.mrb[0].mxu0
        %v1572 = vadd.f32 %v1467, %v1571
        %1573 = vdwg.mxu0
        %v1574 = vmax.f32 %v1536, 0.0
        %v1575 = vmax.f32 %v1538, 0.0
        %v1576 = vmax.f32 %v1540, 0.0
        %v1577 = vmax.f32 %v1542, 0.0
        %v1578 = vmax.f32 %v1546, 0.0
        %v1579 = vmax.f32 %v1548, 0.0
        %v1580 = vmax.f32 %v1550, 0.0
        %v1581 = vmax.f32 %v1552, 0.0
        %v1582 = vmax.f32 %v1556, 0.0
        %v1583 = vmax.f32 %v1558, 0.0
        %v1584 = vmax.f32 %v1560, 0.0
        %v1585 = vmax.f32 %v1562, 0.0
        %v1586 = vmax.f32 %v1566, 0.0
        %v1587 = vmax.f32 %v1568, 0.0
        %v1588 = vmax.f32 %v1570, 0.0
        %v1589 = vmax.f32 %v1572, 0.0
        %v1590 = vpack.c.bf16 %v1576, %v1574
        %v1591 = vpack.c.bf16 %v1577, %v1575
        %v1592 = vpack.c.bf16 %v1580, %v1578
        %v1593 = vpack.c.bf16 %v1581, %v1579
        %v1594 = vpack.c.bf16 %v1584, %v1582
        %v1595 = vpack.c.bf16 %v1585, %v1583
        %v1596 = vpack.c.bf16 %v1588, %v1586
        %v1597 = vpack.c.bf16 %v1589, %v1587
        %v1598 = vld [vmem:[%s1 + $0xd8] sm:$0xf]
        %v1599 = vld [vmem:[%s1 + $0xdc] sm:$0xf]
        %v1600 = vld [vmem:[%s2 + $0x1b0] sm:$0xff]
        %v1601 = vld [vmem:[%s2 + $0x1b8] sm:$0xff]
        %1603 = vset.pattern.permute.xlu0 0
        %1604 = vperm.xlu0 %1603, %v1600
        %v1605 = vpop.permute.xlu0 %1604
        %1608 = vset.pattern.permute.xlu0 0
        %1609 = vperm.xlu0 %1608, %v1601
        %v1610 = vpop.permute.xlu0 %1609
        %v1614 = vunpack.c.l.b16 %v1598
        %v1615 = vunpack.c.l.b16 %v1599
        %v1616 = vpack.c.b16 %v1615, %v1614
        %v1618 = vsel %vm598, %v1616, 0
        %1620 = vmatprep.subr.bf16.mxu0 %v1591
        %1621 = vmatpush1.bf16.msra.mxu0 %v1590
        %1622 = vmatprep.subr.bf16.mxu0 %v1593
        %1623 = vmatpush1.bf16.msra.mxu0 %v1592
        %1624 = vmatprep.subr.bf16.mxu0 %v1595
        %1625 = vmatpush1.bf16.msra.mxu0 %v1594
        %1626 = vmatprep.subr.bf16.mxu0 %v1597
        %1627 = vmatpush1.bf16.msra.mxu0 %v1596
        %1628 = vmatprep.subr.bf16.mxu0 0
        %1629 = vmatpush1.bf16.msra.mxu0 0
        %1630 = vmatprep.subr.bf16.mxu0 0
        %1631 = vmatpush1.bf16.msra.mxu0 0
        %1632 = vmatprep.subr.bf16.mxu0 0
        %1633 = vmatpush1.bf16.msra.mxu0 0
        %1634 = vmatprep.subr.bf16.mxu0 0
        %1635 = vmatpush1.bf16.msra.mxu0 0
        %1636 = vmatprep.subr.bf16.mxu0 0
        %1637 = vmatpush1.bf16.msra.mxu0 0
        %1638 = vmatprep.subr.bf16.mxu0 0
        %1639 = vmatpush1.bf16.msra.mxu0 0
        %1640 = vmatprep.subr.bf16.mxu0 0
        %1641 = vmatpush1.bf16.msra.mxu0 0
        %1642 = vmatprep.subr.bf16.mxu0 0
        %1643 = vmatpush1.bf16.msra.mxu0 0
        %1644 = vmatprep.subr.bf16.mxu0 0
        %1645 = vmatpush1.bf16.msra.mxu0 0
        %1646 = vmatprep.subr.bf16.mxu0 0
        %1647 = vmatpush1.bf16.msra.mxu0 0
        %1648 = vmatprep.subr.bf16.mxu0 0
        %1649 = vmatpush1.bf16.msra.mxu0 0
        %1650 = vmatprep.subr.bf16.mxu0 0
        %1651 = vmatpush1.bf16.msra.mxu0 0
        %1652 = vmatprep.mubr.bf16.mxu0 0
        %1653 = vmatmul.mubr.bf16.gmra.mrb[0].mxu0 %v1618
        %v1654 = vpop.f32.mrb[0].mxu0
        %v1655 = vadd.f32 %v1605, %v1654
        %v1656 = vpop.f32.mrb[0].mxu0
        %v1657 = vadd.f32 %v1605, %v1656
        %v1658 = vpop.f32.mrb[0].mxu0
        %v1659 = vadd.f32 %v1610, %v1658
        %v1660 = vpop.f32.mrb[0].mxu0
        %v1661 = vadd.f32 %v1610, %v1660
        %1662 = vdwg.mxu0
        %v1663 = vadd.f32 %v1655, %v1222
        %v1664 = vadd.f32 %v1657, %v1223
        %v1665 = vadd.f32 %v1659, %v1224
        %v1666 = vadd.f32 %v1661, %v1225
        %v1667 = vmax.f32 %v1663, 0.0
        %v1668 = vmax.f32 %v1664, 0.0
        %v1669 = vmax.f32 %v1665, 0.0
        %v1670 = vmax.f32 %v1666, 0.0
        %v1671 = vld [vmem:[%s1 + $0xe0] sm:$0xf]
        %v1672 = vld [vmem:[%s2 + $0x1c0] sm:$0xff]
        %v1673 = vpack.c.bf16 %v1669, %v1667
        %v1674 = vpack.c.bf16 %v1670, %v1668
        %1676 = vset.pattern.permute.xlu0 0
        %1677 = vperm.xlu0 %1676, %v1672
        %v1678 = vpop.permute.xlu0 %1677
        %v1681 = vsel %vm412, %v1671, 0
        %1683 = vmatprep.subr.bf16.mxu0 %v1674
        %1684 = vmatpush1.bf16.msra.mxu0 %v1673
        %1685 = vmatprep.subr.bf16.mxu0 0
        %1686 = vmatpush1.bf16.msra.mxu0 0
        %1687 = vmatprep.subr.bf16.mxu0 0
        %1688 = vmatpush1.bf16.msra.mxu0 0
        %1689 = vmatprep.subr.bf16.mxu0 0
        %1690 = vmatpush1.bf16.msra.mxu0 0
        %1691 = vmatprep.subr.bf16.mxu0 0
        %1692 = vmatpush1.bf16.msra.mxu0 0
        %1693 = vmatprep.subr.bf16.mxu0 0
        %1694 = vmatpush1.bf16.msra.mxu0 0
        %1695 = vmatprep.subr.bf16.mxu0 0
        %1696 = vmatpush1.bf16.msra.mxu0 0
        %1697 = vmatprep.subr.bf16.mxu0 0
        %1698 = vmatpush1.bf16.msra.mxu0 0
        %1699 = vmatprep.subr.bf16.mxu0 0
        %1700 = vmatpush1.bf16.msra.mxu0 0
        %1701 = vmatprep.subr.bf16.mxu0 0
        %1702 = vmatpush1.bf16.msra.mxu0 0
        %1703 = vmatprep.subr.bf16.mxu0 0
        %1704 = vmatpush1.bf16.msra.mxu0 0
        %1705 = vmatprep.subr.bf16.mxu0 0
        %1706 = vmatpush1.bf16.msra.mxu0 0
        %1707 = vmatprep.subr.bf16.mxu0 0
        %1708 = vmatpush1.bf16.msra.mxu0 0
        %1709 = vmatprep.subr.bf16.mxu0 0
        %1710 = vmatpush1.bf16.msra.mxu0 0
        %1711 = vmatprep.subr.bf16.mxu0 0
        %1712 = vmatpush1.bf16.msra.mxu0 0
        %1713 = vmatprep.subr.bf16.mxu0 0
        %1714 = vmatpush1.bf16.msra.mxu0 0
        %1715 = vmatprep.mubr.bf16.mxu0 0
        %1716 = vmatmul.mubr.bf16.gmra.mrb[0].mxu0 %v1681
        %v1717 = vpop.f32.mrb[0].mxu0
        %v1718 = vadd.f32 %v1678, %v1717
        %v1719 = vpop.f32.mrb[0].mxu0
        %v1720 = vadd.f32 %v1678, %v1719
        %v1721 = vpop.f32.mrb[0].mxu0
        %v1722 = vpop.f32.mrb[0].mxu0
        %1723 = vdwg.mxu0
        %v1726 = vcombine.low %v1718, %v1720
        %1728 = vst [vmem:[%s248] sm:$0x77] %v1726
        %1729 = vst [vmem:[%s229] sm:$0xff] %v1667
        %1730 = vst [vmem:[%s229 + $0x8] sm:$0xff] %v1668
        %1731 = vst [vmem:[%s229 + $0x10] sm:$0xff] %v1669
        %1732 = vst [vmem:[%s229 + $0x18] sm:$0xff] %v1670
        %s1733 = smul.u32 2, %s24
        %p1734 = scmp.lt.s32.totalorder %s23, 1
        %s1735 = scalar_select %p1734, %s23, 1
        %p1736 = scmp.lt.s32.totalorder %s1733, 1
        %s1737 = scalar_select %p1736, %s1733, 1
        %s1738 = smul.addr %s1735, 2
        %s1739 = sadd.s32 %s1737, %s1738
        %s1740 = smul.addr %s1739, 4
        %s1741 = scalar_lea.vmem %s3, %s1740
        %s1742 = sand.u32 %s139, 1
        %s1743 = scalar_lea.sflag [#allocation3], %s1742
        %s1744 = sand.u32 %s139, 1
        %s1745 = smul.addr %s1744, 32
        %s1746 = scalar_lea.vmem [#allocation2], %s1745
        // Predicated region
        $region33: #{tpu_custom_call.1} parent=31 // pred_check
          %p1747 = pneg %p121
        $region34: #{tpu_custom_call.1} parent=31 // pred_check_branch
          %1749 = sbr.rel (%p1747) target = $region36
        $region35: #{tpu_custom_call.1} parent=31 // pred_region
          %s1750 = smul.u32 2, %s24
        $region36: #{tpu_custom_call.1} parent=31 // pred_fallthru
          _
        // Predicated region
        $region37: #{tpu_custom_call.1} parent=31 // pred_check
          %p1751 = pneg %p149
        $region38: #{tpu_custom_call.1} parent=31 // pred_check_branch
          %1753 = sbr.rel (%p1751) target = $region40
        $region39: #{tpu_custom_call.1} parent=31 // pred_region
          %s1754 = smul.u32 2, %s24
          %s1756 = ssub.s32 512, 512
          %1757 = vsyncadd %s1743, %s1756
          %s1758 = smul.addr %s23, 4
          %s1759 = sadd.s32 %s1754, %s1758
          %s1760 = smul.addr %s1759, 128
          %s1761 = scalar_lea.hbm %s4, %s1760
          %s1762 = sshll.u32 %s1746, 4
          %s1763 = int_to_ptr.vmem [resolvable:$true] %s1762
          %1768 = dma.vmem_to_hbm [thread:$0]  %s1763, 512, %s1761, %s1743, 256, 256, 16
        $region40: #{tpu_custom_call.1} parent=31 // pred_fallthru
          _
      $region32: #{tpu_custom_call.1} parent=5 // pred_fallthru
        _
      %p1769 = scmp.le.s32.totalorder 2, %s14
      // Predicated region
      $region41: #{tpu_custom_call.1} parent=5 // pred_check
        %p1770 = pneg %p1769
      $region42: #{tpu_custom_call.1} parent=5 // pred_check_branch
        %1772 = sbr.rel (%p1770) target = $region44
      $region43: #{tpu_custom_call.1} parent=5 // pred_region
        %s1773 = ssub.s32 %s14, 2
        // Predicated region
        $region45: #{tpu_custom_call.1} parent=43 // pred_check
          %p1774 = pneg %p127
        $region46: #{tpu_custom_call.1} parent=43 // pred_check_branch
          %1776 = sbr.rel (%p1774) target = $region48
        $region47: #{tpu_custom_call.1} parent=43 // pred_region
          %s1777 = smul.u32 2, %s26
          %p1778 = scmp.lt.s32.totalorder %s25, 1
          %s1779 = scalar_select %p1778, %s25, 1
          %p1780 = scmp.lt.s32.totalorder %s1777, 1
          %s1781 = scalar_select %p1780, %s1777, 1
          %s1782 = smul.addr %s1779, 2
          %s1783 = sadd.s32 %s1781, %s1782
          %s1784 = smul.addr %s1783, 4
          %s1785 = scalar_lea.vmem %s3, %s1784
        $region48: #{tpu_custom_call.1} parent=43 // pred_fallthru
          _
        // Predicated region
        $region49: #{tpu_custom_call.1} parent=43 // pred_check
          %p1786 = pneg %p155
        $region50: #{tpu_custom_call.1} parent=43 // pred_check_branch
          %1788 = sbr.rel (%p1786) target = $region52
        $region51: #{tpu_custom_call.1} parent=43 // pred_region
          %s1789 = sand.u32 %s140, 1
          %s1790 = scalar_lea.sflag [#allocation3], %s1789
          %s1791 = sand.u32 %s140, 1
          %s1792 = smul.addr %s1791, 32
          %s1793 = scalar_lea.vmem [#allocation2], %s1792
          %1794 = dma.done %s1790, 512
        $region52: #{tpu_custom_call.1} parent=43 // pred_fallthru
          _
      $region44: #{tpu_custom_call.1} parent=5 // pred_fallthru
        _
    $region6: #{tpu_custom_call.1} parent=1 // loop_footer
      %s18 = sadd.s32 1, %s14
    $region7: #{tpu_custom_call.1} parent=1 // loop_footer_branch
      %13 = sbr.rel target = $region3
    $region8: #{tpu_custom_call.1} parent=1 // loop_exit
      _
    %1795 = vsyncpa [#allocation3], 1
    %s1796 = scalar_lea.sflag [#allocation3], 1
    %1797 = vsyncpa %s1796, 1

</llo_original>
